<compile_context>
chip_gen: v7x
topology: tpu7x:2x2x1
jax: 0.10.0
libtpu: 0.0.40
codegen_flags: <defaults>
</compile_context>

<pallas_src>
import functools
import math

import jax
import jax.numpy as jnp
from jax import lax
from jax.experimental import pallas as pl
from jax.experimental.pallas import tpu as pltpu


_NEG_INF = -1e30  # finite "masked" value: avoids exp(-inf - -inf) NaNs


def _pick_tile(n, target):
    """Largest tile <= target that divides n (multiple of 8 when tiling)."""
    if n <= target:
        return n
    for t in range(target, 7, -1):
        if n % t == 0 and t % 8 == 0:
            return t
    return n  # fall back to full dimension (always legal)


# ---------------------------------------------------------------------------
# Kernel 1: fused QKV projection   q, k, v = split(x @ Wqkv + b)
# (the 1/sqrt(D) scale is already folded into the q columns of Wqkv / bqkv)
# ---------------------------------------------------------------------------
def _qkv_proj_kernel(x_ref, wqkv_ref, bqkv_ref, q_ref, k_ref, v_ref):
    C = q_ref.shape[-1]
    # bf16 operands, f32 accumulation -> native MXU fast path.
    qkv = jnp.dot(x_ref[...], wqkv_ref[...],
                  preferred_element_type=jnp.float32) + bqkv_ref[...]
    q_ref[...] = qkv[:, 0:C].astype(q_ref.dtype)
    k_ref[...] = qkv[:, C:2 * C].astype(k_ref.dtype)
    v_ref[...] = qkv[:, 2 * C:3 * C].astype(v_ref.dtype)


# ---------------------------------------------------------------------------
# Kernel 2: causal flash attention (online softmax over k-tiles) fused with
# the c_proj output projection.  Grid = (B, num_q_tiles, num_k_tiles).
# ---------------------------------------------------------------------------
def _flash_attn_proj_kernel(q_ref, k_ref, v_ref, wproj_ref, bproj_ref, o_ref,
                            m_scr, l_scr, acc_scr, *, n_head, tq, tk):
    qi = pl.program_id(1)
    ki = pl.program_id(2)
    nk = pl.num_programs(2)
    C = q_ref.shape[-1]
    D = C // n_head

    @pl.when(ki == 0)
    def _init():
        m_scr[...] = jnp.full_like(m_scr, _NEG_INF)
        l_scr[...] = jnp.zeros_like(l_scr)
        acc_scr[...] = jnp.zeros_like(acc_scr)

    q_start = qi * tq
    k_start = ki * tk

    # Skip k-tiles that lie entirely above the causal diagonal.
    @pl.when(k_start <= q_start + tq - 1)
    def _compute():
        q = q_ref[...]          # (tq, C) bf16, already scaled by 1/sqrt(D)
        k = k_ref[...]          # (tk, C) bf16
        v = v_ref[...]          # (tk, C) bf16
        # per-tile causal mask built from grid offsets (never a full (T, T))
        row = q_start + lax.broadcasted_iota(jnp.int32, (tq, tk), 0)
        col = k_start + lax.broadcasted_iota(jnp.int32, (tq, tk), 1)
        causal = row >= col

        # Static head loop; all per-head state goes straight into VMEM scratch
        # slabs (bounded live ranges, no concatenate at the end).
        for h in range(n_head):
            lo, hi = h * D, (h + 1) * D
            qh = q[:, lo:hi]
            kh = k[:, lo:hi]
            vh = v[:, lo:hi]
            # q @ k^T with the transpose folded into dot_general (no XLU xpose)
            s = lax.dot_general(qh, kh, (((1,), (1,)), ((), ())),
                                preferred_element_type=jnp.float32)  # (tq, tk)
            s = jnp.where(causal, s, _NEG_INF)

            m_prev = m_scr[:, h:h + 1]                               # (tq, 1)
            m_new = jnp.maximum(m_prev, jnp.max(s, axis=-1, keepdims=True))
            alpha = jnp.exp(m_prev - m_new)
            p = jnp.exp(s - m_new)                                   # f32
            l_scr[:, h:h + 1] = (alpha * l_scr[:, h:h + 1]
                                 + jnp.sum(p, axis=-1, keepdims=True))
            acc_scr[:, lo:hi] = (alpha * acc_scr[:, lo:hi]
                                 + lax.dot_general(p.astype(v.dtype), vh,
                                                   (((1,), (0,)), ((), ())),
                                                   preferred_element_type=jnp.float32))
            m_scr[:, h:h + 1] = m_new

    @pl.when(ki == nk - 1)
    def _finalize():
        # Per-head softmax normalization; reciprocal goes to the EUP slot and
        # approx is fine since the result is cast to bf16 right after.
        for h in range(n_head):
            lo, hi = h * D, (h + 1) * D
            inv_l = pl.reciprocal(l_scr[:, h:h + 1], approx=True)
            acc_scr[:, lo:hi] = acc_scr[:, lo:hi] * inv_l
        # TODO(synk): attention dropout omitted (eval mode / dropout == 0.0)
        y = acc_scr[...].astype(wproj_ref.dtype)                     # (tq, C) bf16
        out = jnp.dot(y, wproj_ref[...],
                      preferred_element_type=jnp.float32) + bproj_ref[...]
        # TODO(synk): residual dropout omitted (eval mode / dropout == 0.0)
        o_ref[...] = out.astype(o_ref.dtype)


# ---------------------------------------------------------------------------
# Wrappers
# ---------------------------------------------------------------------------
def prepare_params(w_attn, b_attn, w_proj, b_proj, n_head,
                   param_dtype=jnp.bfloat16):
    """One-time weight prep (do NOT redo per forward call).

    - transpose PyTorch Linear weights to x @ W layout
    - fold the 1/sqrt(D) attention scale into the q columns of c_attn
    - cast matmul operands to bf16 (MXU fast path); biases stay f32
    """
    three_c, C = w_attn.shape
    assert three_c == 3 * C
    D = C // n_head
    scale = 1.0 / math.sqrt(D)
    col_scale = jnp.concatenate([jnp.full((C,), scale, jnp.float32),
                                 jnp.ones((2 * C,), jnp.float32)])
    wqkv = (w_attn.T.astype(jnp.float32) * col_scale[None, :]).astype(param_dtype)
    bqkv = (b_attn.astype(jnp.float32) * col_scale).reshape(1, 3 * C)
    wproj = w_proj.T.astype(param_dtype)
    bproj = b_proj.astype(jnp.float32).reshape(1, C)
    return wqkv, bqkv, wproj, bproj


@functools.partial(jax.jit, static_argnames=("n_head", "q_tile", "kv_tile"))
def causal_self_attention(x, wqkv, bqkv, wproj, bproj, *, n_head,
                          q_tile=128, kv_tile=128):
    """Forward pass of CausalSelfAttention (eval mode / dropout == 0)."""
    B, T, C = x.shape
    out_dtype = x.dtype
    xb = x.astype(wqkv.dtype)             # bf16 MXU operands

    # ---- kernel 1: QKV projection, tiled over (batch, seq) ----
    tt = _pick_tile(T, 256)
    qkv_shape = jax.ShapeDtypeStruct((B, T, C), wqkv.dtype)
    seq_blk = lambda b, t: (b, t, 0)
    q, k, v = pl.pallas_call(
        _qkv_proj_kernel,
        out_shape=(qkv_shape, qkv_shape, qkv_shape),
        grid_spec=pltpu.PrefetchScalarGridSpec(
            num_scalar_prefetch=0,
            grid=(B, T // tt),
            in_specs=[
                pl.BlockSpec((pl.Squeezed(), tt, C), seq_blk),
                pl.BlockSpec((C, 3 * C), lambda b, t: (0, 0)),
                pl.BlockSpec((1, 3 * C), lambda b, t: (0, 0)),
            ],
            out_specs=[
                pl.BlockSpec((pl.Squeezed(), tt, C), seq_blk),
                pl.BlockSpec((pl.Squeezed(), tt, C), seq_blk),
                pl.BlockSpec((pl.Squeezed(), tt, C), seq_blk),
            ],
        ),
        compiler_params=pltpu.CompilerParams(
            dimension_semantics=("parallel", "parallel")),
    )(xb, wqkv, bqkv)

    # ---- kernel 2: flash attention + output projection ----
    tq = _pick_tile(T, q_tile)
    tk = _pick_tile(T, kv_tile)
    nq, nk = T // tq, T // tk
    kernel = functools.partial(_flash_attn_proj_kernel,
                               n_head=n_head, tq=tq, tk=tk)
    out = pl.pallas_call(
        kernel,
        out_shape=jax.ShapeDtypeStruct((B, T, C), out_dtype),
        grid_spec=pltpu.PrefetchScalarGridSpec(
            num_scalar_prefetch=0,
            grid=(B, nq, nk),                       # two parallel axes (v7x: 2 TCs)
            in_specs=[
                pl.BlockSpec((pl.Squeezed(), tq, C), lambda b, qi, ki: (b, qi, 0)),
                pl.BlockSpec((pl.Squeezed(), tk, C), lambda b, qi, ki: (b, ki, 0)),
                pl.BlockSpec((pl.Squeezed(), tk, C), lambda b, qi, ki: (b, ki, 0)),
                pl.BlockSpec((C, C), lambda b, qi, ki: (0, 0)),
                pl.BlockSpec((1, C), lambda b, qi, ki: (0, 0)),
            ],
            out_specs=pl.BlockSpec((pl.Squeezed(), tq, C),
                                   lambda b, qi, ki: (b, qi, 0)),
            scratch_shapes=[
                pltpu.VMEM((tq, n_head), jnp.float32),   # running max per head
                pltpu.VMEM((tq, n_head), jnp.float32),   # running denom per head
                pltpu.VMEM((tq, C), jnp.float32),        # unnormalized output slab
            ],
        ),
        compiler_params=pltpu.CompilerParams(
            dimension_semantics=("parallel", "parallel", "arbitrary")),
    )(q, k, v, wproj, bproj)
    return out


def _reference(x, w_attn, b_attn, w_proj, b_proj, n_head):
    """Pure-JAX f32 reference mirroring the PyTorch forward (eval mode)."""
    B, T, C = x.shape
    D = C // n_head
    qkv = x @ w_attn.T + b_attn
    q, k, v = jnp.split(qkv, 3, axis=-1)

    def heads(t):  # (B, T, C) -> (B, H, T, D)
        return jnp.transpose(t.reshape(B, T, n_head, D), (0, 2, 1, 3))

    q, k, v = heads(q), heads(k), heads(v)
    att = jnp.einsum("bhtd,bhsd->bhts", q, k) / math.sqrt(D)
    mask = jnp.tril(jnp.ones((T, T), bool))
    att = jnp.where(mask[None, None], att, -jnp.inf)
    att = jax.nn.softmax(att, axis=-1)
    y = jnp.einsum("bhts,bhsd->bhtd", att, v)
    y = jnp.transpose(y, (0, 2, 1, 3)).reshape(B, T, C)
    return y @ w_proj.T + b_proj


if __name__ == "__main__":
    # config: n_embd=32, n_head=4, bias=True, dropout=0.0
    B, T, C, n_head = 2, 8, 32, 4

    key = jax.random.PRNGKey(0)
    kx, kw1, kb1, kw2, kb2 = jax.random.split(key, 5)
    x = jax.random.normal(kx, (B, T, C), dtype=jnp.float32)
    w_attn = jax.random.normal(kw1, (3 * C, C), dtype=jnp.float32) * 0.02
    b_attn = jax.random.normal(kb1, (3 * C,), dtype=jnp.float32) * 0.02
    w_proj = jax.random.normal(kw2, (C, C), dtype=jnp.float32) * 0.02
    b_proj = jax.random.normal(kb2, (C,), dtype=jnp.float32) * 0.02

    params = prepare_params(w_attn, b_attn, w_proj, b_proj, n_head)
    y = causal_self_attention(x, *params, n_head=n_head)
    y = jax.block_until_ready(y)

    y_ref = _reference(x, w_attn, b_attn, w_proj, b_proj, n_head)
    assert y.shape == (B, T, C)
    max_err = float(jnp.max(jnp.abs(y - y_ref)))
    # bf16 MXU operands + approx reciprocal -> compare with bf16-level tolerance
    assert jnp.allclose(y, y_ref, atol=1e-2, rtol=1e-2), (
        f"mismatch vs reference (max abs err {max_err})")
    print("KERNEL_OK")
</pallas_src>

<mosaic_0001>
module attributes {stable_mosaic.version = 11 : i64} {
  func.func @_qkv_proj_kernel(%arg0: i32, %arg1: i32, %arg2: memref<1x8x32xbf16, #tpu.memory_space<vmem>>, %arg3: memref<32x96xbf16, #tpu.memory_space<vmem>>, %arg4: memref<1x96xf32, #tpu.memory_space<vmem>>, %arg5: memref<1x8x32xbf16, #tpu.memory_space<vmem>>, %arg6: memref<1x8x32xbf16, #tpu.memory_space<vmem>>, %arg7: memref<1x8x32xbf16, #tpu.memory_space<vmem>>) attributes {dimension_semantics = [#tpu.dimension_semantics<parallel>, #tpu.dimension_semantics<parallel>], iteration_bounds = array<i64: 2, 1>, scalar_prefetch = 0 : i64, scratch_operands = 0 : i64, tpu.core_type = #tpu.core_type<tc>, window_params = [{transform_indices = @transform_0, window_bounds = array<i64: 1, 8, 32>}, {pipeline_mode = #tpu.pipeline_mode<synchronous>, transform_indices = @transform_1, window_bounds = array<i64: 32, 96>}, {pipeline_mode = #tpu.pipeline_mode<synchronous>, transform_indices = @transform_2, window_bounds = array<i64: 1, 96>}, {transform_indices = @transform_3, window_bounds = array<i64: 1, 8, 32>}, {transform_indices = @transform_4, window_bounds = array<i64: 1, 8, 32>}, {transform_indices = @transform_5, window_bounds = array<i64: 1, 8, 32>}]} {
    %c0 = arith.constant 0 : index
    %c0_0 = arith.constant 0 : index
    %c0_1 = arith.constant 0 : index
    %0 = vector.load %arg2[%c0, %c0_0, %c0_1] : memref<1x8x32xbf16, #tpu.memory_space<vmem>>, vector<1x8x32xbf16>
    %1 = vector.shape_cast %0 : vector<1x8x32xbf16> to vector<8x32xbf16>
    %c0_2 = arith.constant 0 : index
    %c0_3 = arith.constant 0 : index
    %2 = vector.load %arg3[%c0_2, %c0_3] : memref<32x96xbf16, #tpu.memory_space<vmem>>, vector<32x96xbf16>
    %cst = arith.constant dense<0.000000e+00> : vector<8x96xf32>
    %3 = tpu.matmul %1, %2, %cst {dimension_numbers = #tpu.dot_dimension_numbers<[1], [0], [0], [1], [0, 0, 1, 1], [], []>} : vector<8x32xbf16>, vector<32x96xbf16>, vector<8x96xf32> -> vector<8x96xf32>
    %c0_4 = arith.constant 0 : index
    %c0_5 = arith.constant 0 : index
    %4 = vector.load %arg4[%c0_4, %c0_5] : memref<1x96xf32, #tpu.memory_space<vmem>>, vector<1x96xf32>
    %5 = vector.broadcast %4 : vector<1x96xf32> to vector<8x96xf32>
    %6 = arith.addf %3, %5 : vector<8x96xf32>
    %7 = vector.extract_strided_slice %6 {offsets = [0, 0], sizes = [8, 32], strides = [1, 1]} : vector<8x96xf32> to vector<8x32xf32>
    %8 = arith.truncf %7 : vector<8x32xf32> to vector<8x32xbf16>
    %c0_6 = arith.constant 0 : index
    %c0_7 = arith.constant 0 : index
    %c0_8 = arith.constant 0 : index
    %9 = vector.load %arg5[%c0_6, %c0_7, %c0_8] : memref<1x8x32xbf16, #tpu.memory_space<vmem>>, vector<1x8x32xbf16>
    %10 = vector.shape_cast %9 : vector<1x8x32xbf16> to vector<8x32xbf16>
    %11 = vector.shape_cast %8 : vector<8x32xbf16> to vector<1x8x32xbf16>
    tpu.vector_store %arg5[%c0_6, %c0_7, %c0_8], %11 {strides = array<i32>} : memref<1x8x32xbf16, #tpu.memory_space<vmem>>, vector<1x8x32xbf16>,
    %12 = vector.extract_strided_slice %6 {offsets = [0, 32], sizes = [8, 32], strides = [1, 1]} : vector<8x96xf32> to vector<8x32xf32>
    %13 = arith.truncf %12 : vector<8x32xf32> to vector<8x32xbf16>
    %c0_9 = arith.constant 0 : index
    %c0_10 = arith.constant 0 : index
    %c0_11 = arith.constant 0 : index
    %14 = vector.load %arg6[%c0_9, %c0_10, %c0_11] : memref<1x8x32xbf16, #tpu.memory_space<vmem>>, vector<1x8x32xbf16>
    %15 = vector.shape_cast %14 : vector<1x8x32xbf16> to vector<8x32xbf16>
    %16 = vector.shape_cast %13 : vector<8x32xbf16> to vector<1x8x32xbf16>
    tpu.vector_store %arg6[%c0_9, %c0_10, %c0_11], %16 {strides = array<i32>} : memref<1x8x32xbf16, #tpu.memory_space<vmem>>, vector<1x8x32xbf16>,
    %17 = vector.extract_strided_slice %6 {offsets = [0, 64], sizes = [8, 32], strides = [1, 1]} : vector<8x96xf32> to vector<8x32xf32>
    %18 = arith.truncf %17 : vector<8x32xf32> to vector<8x32xbf16>
    %c0_12 = arith.constant 0 : index
    %c0_13 = arith.constant 0 : index
    %c0_14 = arith.constant 0 : index
    %19 = vector.load %arg7[%c0_12, %c0_13, %c0_14] : memref<1x8x32xbf16, #tpu.memory_space<vmem>>, vector<1x8x32xbf16>
    %20 = vector.shape_cast %19 : vector<1x8x32xbf16> to vector<8x32xbf16>
    %21 = vector.shape_cast %18 : vector<8x32xbf16> to vector<1x8x32xbf16>
    tpu.vector_store %arg7[%c0_12, %c0_13, %c0_14], %21 {strides = array<i32>} : memref<1x8x32xbf16, #tpu.memory_space<vmem>>, vector<1x8x32xbf16>,
    return
  }
  func.func @transform_0(%arg0: i32, %arg1: i32) -> (i32, i32, i32) {
    %c0_i32 = arith.constant 0 : i32
    %c0_i32_0 = arith.constant 0 : i32
    return %arg0, %arg1, %c0_i32 : i32, i32, i32
  }
  func.func @transform_1(%arg0: i32, %arg1: i32) -> (i32, i32) {
    %c0_i32 = arith.constant 0 : i32
    %c0_i32_0 = arith.constant 0 : i32
    %c0_i32_1 = arith.constant 0 : i32
    return %c0_i32, %c0_i32_0 : i32, i32
  }
  func.func @transform_2(%arg0: i32, %arg1: i32) -> (i32, i32) {
    %c0_i32 = arith.constant 0 : i32
    %c0_i32_0 = arith.constant 0 : i32
    %c0_i32_1 = arith.constant 0 : i32
    return %c0_i32, %c0_i32_0 : i32, i32
  }
  func.func @transform_3(%arg0: i32, %arg1: i32) -> (i32, i32, i32) {
    %c0_i32 = arith.constant 0 : i32
    %c0_i32_0 = arith.constant 0 : i32
    return %arg0, %arg1, %c0_i32 : i32, i32, i32
  }
  func.func @transform_4(%arg0: i32, %arg1: i32) -> (i32, i32, i32) {
    %c0_i32 = arith.constant 0 : i32
    %c0_i32_0 = arith.constant 0 : i32
    return %arg0, %arg1, %c0_i32 : i32, i32, i32
  }
  func.func @transform_5(%arg0: i32, %arg1: i32) -> (i32, i32, i32) {
    %c0_i32 = arith.constant 0 : i32
    %c0_i32_0 = arith.constant 0 : i32
    return %arg0, %arg1, %c0_i32 : i32, i32, i32
  }
}

module attributes {stable_mosaic.version = 11 : i64} {
  func.func @_flash_attn_proj_kernel(%arg0: i32, %arg1: i32, %arg2: i32, %arg3: memref<1x8x32xbf16, #tpu.memory_space<vmem>>, %arg4: memref<1x8x32xbf16, #tpu.memory_space<vmem>>, %arg5: memref<1x8x32xbf16, #tpu.memory_space<vmem>>, %arg6: memref<32x32xbf16, #tpu.memory_space<vmem>>, %arg7: memref<1x32xf32, #tpu.memory_space<vmem>>, %arg8: memref<1x8x32xf32, #tpu.memory_space<vmem>>, %arg9: memref<8x4xf32, #tpu.memory_space<vmem>>, %arg10: memref<8x4xf32, #tpu.memory_space<vmem>>, %arg11: memref<8x32xf32, #tpu.memory_space<vmem>>) attributes {dimension_semantics = [#tpu.dimension_semantics<parallel>, #tpu.dimension_semantics<parallel>, #tpu.dimension_semantics<arbitrary>], iteration_bounds = array<i64: 2, 1, 1>, scalar_prefetch = 0 : i64, scratch_operands = 3 : i64, tpu.core_type = #tpu.core_type<tc>, window_params = [{transform_indices = @transform_0, window_bounds = array<i64: 1, 8, 32>}, {transform_indices = @transform_1, window_bounds = array<i64: 1, 8, 32>}, {transform_indices = @transform_2, window_bounds = array<i64: 1, 8, 32>}, {pipeline_mode = #tpu.pipeline_mode<synchronous>, transform_indices = @transform_3, window_bounds = array<i64: 32, 32>}, {pipeline_mode = #tpu.pipeline_mode<synchronous>, transform_indices = @transform_4, window_bounds = array<i64: 1, 32>}, {transform_indices = @transform_5, window_bounds = array<i64: 1, 8, 32>}]} {
    %c0_i32 = arith.constant 0 : i32
    %0 = arith.cmpi eq, %arg2, %c0_i32 : i32
    %1 = arith.extui %0 : i1 to i32
    %c0_i32_0 = arith.constant 0 : i32
    %2 = arith.cmpi ne, %1, %c0_i32_0 : i32
    scf.if %2 {
      %cst = arith.constant -1.000000e+30 : f32
      %13 = vector.broadcast %cst : f32 to vector<8x4xf32>
      %c0 = arith.constant 0 : index
      %c0_6 = arith.constant 0 : index
      %14 = vector.load %arg9[%c0, %c0_6] : memref<8x4xf32, #tpu.memory_space<vmem>>, vector<8x4xf32>
      tpu.vector_store %arg9[%c0, %c0_6], %13 {strides = array<i32>} : memref<8x4xf32, #tpu.memory_space<vmem>>, vector<8x4xf32>,
      %cst_7 = arith.constant 0.000000e+00 : f32
      %15 = vector.broadcast %cst_7 : f32 to vector<8x4xf32>
      %c0_8 = arith.constant 0 : index
      %c0_9 = arith.constant 0 : index
      %16 = vector.load %arg10[%c0_8, %c0_9] : memref<8x4xf32, #tpu.memory_space<vmem>>, vector<8x4xf32>
      tpu.vector_store %arg10[%c0_8, %c0_9], %15 {strides = array<i32>} : memref<8x4xf32, #tpu.memory_space<vmem>>, vector<8x4xf32>,
      %cst_10 = arith.constant 0.000000e+00 : f32
      %17 = vector.broadcast %cst_10 : f32 to vector<8x32xf32>
      %c0_11 = arith.constant 0 : index
      %c0_12 = arith.constant 0 : index
      %18 = vector.load %arg11[%c0_11, %c0_12] : memref<8x32xf32, #tpu.memory_space<vmem>>, vector<8x32xf32>
      tpu.vector_store %arg11[%c0_11, %c0_12], %17 {strides = array<i32>} : memref<8x32xf32, #tpu.memory_space<vmem>>, vector<8x32xf32>,
    } else {
    }
    %c8_i32 = arith.constant 8 : i32
    %3 = arith.muli %arg1, %c8_i32 : i32
    %c8_i32_1 = arith.constant 8 : i32
    %4 = arith.muli %arg2, %c8_i32_1 : i32
    %c8_i32_2 = arith.constant 8 : i32
    %5 = arith.addi %3, %c8_i32_2 : i32
    %c1_i32 = arith.constant 1 : i32
    %6 = arith.subi %5, %c1_i32 : i32
    %7 = arith.cmpi sle, %4, %6 : i32
    %8 = arith.extui %7 : i1 to i32
    %c0_i32_3 = arith.constant 0 : i32
    %9 = arith.cmpi ne, %8, %c0_i32_3 : i32
    scf.if %9 {
      %c0 = arith.constant 0 : index
      %c0_6 = arith.constant 0 : index
      %c0_7 = arith.constant 0 : index
      %13 = vector.load %arg3[%c0, %c0_6, %c0_7] : memref<1x8x32xbf16, #tpu.memory_space<vmem>>, vector<1x8x32xbf16>
      %14 = vector.shape_cast %13 : vector<1x8x32xbf16> to vector<8x32xbf16>
      %c0_8 = arith.constant 0 : index
      %c0_9 = arith.constant 0 : index
      %c0_10 = arith.constant 0 : index
      %15 = vector.load %arg4[%c0_8, %c0_9, %c0_10] : memref<1x8x32xbf16, #tpu.memory_space<vmem>>, vector<1x8x32xbf16>
      %16 = vector.shape_cast %15 : vector<1x8x32xbf16> to vector<8x32xbf16>
      %c0_11 = arith.constant 0 : index
      %c0_12 = arith.constant 0 : index
      %c0_13 = arith.constant 0 : index
      %17 = vector.load %arg5[%c0_11, %c0_12, %c0_13] : memref<1x8x32xbf16, #tpu.memory_space<vmem>>, vector<1x8x32xbf16>
      %18 = vector.shape_cast %17 : vector<1x8x32xbf16> to vector<8x32xbf16>
      %19 = tpu.iota {dimensions = array<i32: 0>} : vector<8x8xi32>
      %20 = vector.broadcast %3 : i32 to vector<8x8xi32>
      %21 = arith.addi %20, %19 : vector<8x8xi32>
      %22 = tpu.iota {dimensions = array<i32: 1>} : vector<8x8xi32>
      %23 = vector.broadcast %4 : i32 to vector<8x8xi32>
      %24 = arith.addi %23, %22 : vector<8x8xi32>
      %25 = arith.cmpi sge, %21, %24 : vector<8x8xi32>
      %26 = vector.extract_strided_slice %14 {offsets = [0, 0], sizes = [8, 8], strides = [1, 1]} : vector<8x32xbf16> to vector<8x8xbf16>
      %27 = vector.extract_strided_slice %16 {offsets = [0, 0], sizes = [8, 8], strides = [1, 1]} : vector<8x32xbf16> to vector<8x8xbf16>
      %28 = vector.extract_strided_slice %18 {offsets = [0, 0], sizes = [8, 8], strides = [1, 1]} : vector<8x32xbf16> to vector<8x8xbf16>
      %cst = arith.constant dense<0.000000e+00> : vector<8x8xf32>
      %29 = tpu.matmul %26, %27, %cst {dimension_numbers = #tpu.dot_dimension_numbers<[1], [1], [0], [0], [0, 0, 1, 0], [], []>} : vector<8x8xbf16>, vector<8x8xbf16>, vector<8x8xf32> -> vector<8x8xf32>
      %cst_14 = arith.constant -1.000000e+30 : f32
      %30 = vector.broadcast %cst_14 : f32 to vector<8x8xf32>
      %31 = arith.select %25, %29, %30 : vector<8x8xi1>, vector<8x8xf32>
      %c0_15 = arith.constant 0 : index
      %c0_16 = arith.constant 0 : index
      %32 = vector.load %arg9[%c0_15, %c0_16] : memref<8x4xf32, #tpu.memory_space<vmem>>, vector<8x1xf32>
      %cst_17 = arith.constant dense<0xFF800000> : vector<8xf32>
      %33 = vector.multi_reduction <maximumf>, %31, %cst_17 [1] : vector<8x8xf32> to vector<8xf32>
      %34 = vector.shape_cast %33 : vector<8xf32> to vector<8x1xf32>
      %35 = arith.maximumf %32, %34 : vector<8x1xf32>
      %36 = arith.subf %32, %35 : vector<8x1xf32>
      %37 = math.exp %36 : vector<8x1xf32>
      %38 = vector.broadcast %35 : vector<8x1xf32> to vector<8x8xf32>
      %39 = arith.subf %31, %38 : vector<8x8xf32>
      %40 = math.exp %39 : vector<8x8xf32>
      %c0_18 = arith.constant 0 : index
      %c0_19 = arith.constant 0 : index
      %41 = vector.load %arg10[%c0_18, %c0_19] : memref<8x4xf32, #tpu.memory_space<vmem>>, vector<8x1xf32>
      %42 = arith.mulf %37, %41 : vector<8x1xf32>
      %cst_20 = arith.constant dense<0.000000e+00> : vector<8xf32>
      %43 = vector.multi_reduction <add>, %40, %cst_20 [1] : vector<8x8xf32> to vector<8xf32>
      %44 = vector.shape_cast %43 : vector<8xf32> to vector<8x1xf32>
      %45 = arith.addf %42, %44 : vector<8x1xf32>
      %c0_21 = arith.constant 0 : index
      %c0_22 = arith.constant 0 : index
      %46 = vector.load %arg10[%c0_21, %c0_22] : memref<8x4xf32, #tpu.memory_space<vmem>>, vector<8x1xf32>
      tpu.vector_store %arg10[%c0_21, %c0_22], %45 {strides = array<i32>} : memref<8x4xf32, #tpu.memory_space<vmem>>, vector<8x1xf32>,
      %c0_23 = arith.constant 0 : index
      %c0_24 = arith.constant 0 : index
      %47 = vector.load %arg11[%c0_23, %c0_24] : memref<8x32xf32, #tpu.memory_space<vmem>>, vector<8x8xf32>
      %48 = vector.broadcast %37 : vector<8x1xf32> to vector<8x8xf32>
      %49 = arith.mulf %48, %47 : vector<8x8xf32>
      %50 = arith.truncf %40 : vector<8x8xf32> to vector<8x8xbf16>
      %cst_25 = arith.constant dense<0.000000e+00> : vector<8x8xf32>
      %51 = tpu.matmul %50, %28, %cst_25 {dimension_numbers = #tpu.dot_dimension_numbers<[1], [0], [0], [1], [0, 0, 1, 1], [], []>} : vector<8x8xbf16>, vector<8x8xbf16>, vector<8x8xf32> -> vector<8x8xf32>
      %52 = arith.addf %49, %51 : vector<8x8xf32>
      %c0_26 = arith.constant 0 : index
      %c0_27 = arith.constant 0 : index
      %53 = vector.load %arg11[%c0_26, %c0_27] : memref<8x32xf32, #tpu.memory_space<vmem>>, vector<8x8xf32>
      tpu.vector_store %arg11[%c0_26, %c0_27], %52 {strides = array<i32>} : memref<8x32xf32, #tpu.memory_space<vmem>>, vector<8x8xf32>,
      %c0_28 = arith.constant 0 : index
      %c0_29 = arith.constant 0 : index
      %54 = vector.load %arg9[%c0_28, %c0_29] : memref<8x4xf32, #tpu.memory_space<vmem>>, vector<8x1xf32>
      tpu.vector_store %arg9[%c0_28, %c0_29], %35 {strides = array<i32>} : memref<8x4xf32, #tpu.memory_space<vmem>>, vector<8x1xf32>,
      %55 = vector.extract_strided_slice %14 {offsets = [0, 8], sizes = [8, 8], strides = [1, 1]} : vector<8x32xbf16> to vector<8x8xbf16>
      %56 = vector.extract_strided_slice %16 {offsets = [0, 8], sizes = [8, 8], strides = [1, 1]} : vector<8x32xbf16> to vector<8x8xbf16>
      %57 = vector.extract_strided_slice %18 {offsets = [0, 8], sizes = [8, 8], strides = [1, 1]} : vector<8x32xbf16> to vector<8x8xbf16>
      %cst_30 = arith.constant dense<0.000000e+00> : vector<8x8xf32>
      %58 = tpu.matmul %55, %56, %cst_30 {dimension_numbers = #tpu.dot_dimension_numbers<[1], [1], [0], [0], [0, 0, 1, 0], [], []>} : vector<8x8xbf16>, vector<8x8xbf16>, vector<8x8xf32> -> vector<8x8xf32>
      %cst_31 = arith.constant -1.000000e+30 : f32
      %59 = vector.broadcast %cst_31 : f32 to vector<8x8xf32>
      %60 = arith.select %25, %58, %59 : vector<8x8xi1>, vector<8x8xf32>
      %c0_32 = arith.constant 0 : index
      %c1 = arith.constant 1 : index
      %61 = vector.load %arg9[%c0_32, %c1] : memref<8x4xf32, #tpu.memory_space<vmem>>, vector<8x1xf32>
      %cst_33 = arith.constant dense<0xFF800000> : vector<8xf32>
      %62 = vector.multi_reduction <maximumf>, %60, %cst_33 [1] : vector<8x8xf32> to vector<8xf32>
      %63 = vector.shape_cast %62 : vector<8xf32> to vector<8x1xf32>
      %64 = arith.maximumf %61, %63 : vector<8x1xf32>
      %65 = arith.subf %61, %64 : vector<8x1xf32>
      %66 = math.exp %65 : vector<8x1xf32>
      %67 = vector.broadcast %64 : vector<8x1xf32> to vector<8x8xf32>
      %68 = arith.subf %60, %67 : vector<8x8xf32>
      %69 = math.exp %68 : vector<8x8xf32>
      %c0_34 = arith.constant 0 : index
      %c1_35 = arith.constant 1 : index
      %70 = vector.load %arg10[%c0_34, %c1_35] : memref<8x4xf32, #tpu.memory_space<vmem>>, vector<8x1xf32>
      %71 = arith.mulf %66, %70 : vector<8x1xf32>
      %cst_36 = arith.constant dense<0.000000e+00> : vector<8xf32>
      %72 = vector.multi_reduction <add>, %69, %cst_36 [1] : vector<8x8xf32> to vector<8xf32>
      %73 = vector.shape_cast %72 : vector<8xf32> to vector<8x1xf32>
      %74 = arith.addf %71, %73 : vector<8x1xf32>
      %c0_37 = arith.constant 0 : index
      %c1_38 = arith.constant 1 : index
      %75 = vector.load %arg10[%c0_37, %c1_38] : memref<8x4xf32, #tpu.memory_space<vmem>>, vector<8x1xf32>
      tpu.vector_store %arg10[%c0_37, %c1_38], %74 {strides = array<i32>} : memref<8x4xf32, #tpu.memory_space<vmem>>, vector<8x1xf32>,
      %c0_39 = arith.constant 0 : index
      %c8 = arith.constant 8 : index
      %76 = vector.load %arg11[%c0_39, %c8] : memref<8x32xf32, #tpu.memory_space<vmem>>, vector<8x8xf32>
      %77 = vector.broadcast %66 : vector<8x1xf32> to vector<8x8xf32>
      %78 = arith.mulf %77, %76 : vector<8x8xf32>
      %79 = arith.truncf %69 : vector<8x8xf32> to vector<8x8xbf16>
      %cst_40 = arith.constant dense<0.000000e+00> : vector<8x8xf32>
      %80 = tpu.matmul %79, %57, %cst_40 {dimension_numbers = #tpu.dot_dimension_numbers<[1], [0], [0], [1], [0, 0, 1, 1], [], []>} : vector<8x8xbf16>, vector<8x8xbf16>, vector<8x8xf32> -> vector<8x8xf32>
      %81 = arith.addf %78, %80 : vector<8x8xf32>
      %c0_41 = arith.constant 0 : index
      %c8_42 = arith.constant 8 : index
      %82 = vector.load %arg11[%c0_41, %c8_42] : memref<8x32xf32, #tpu.memory_space<vmem>>, vector<8x8xf32>
      tpu.vector_store %arg11[%c0_41, %c8_42], %81 {strides = array<i32>} : memref<8x32xf32, #tpu.memory_space<vmem>>, vector<8x8xf32>,
      %c0_43 = arith.constant 0 : index
      %c1_44 = arith.constant 1 : index
      %83 = vector.load %arg9[%c0_43, %c1_44] : memref<8x4xf32, #tpu.memory_space<vmem>>, vector<8x1xf32>
      tpu.vector_store %arg9[%c0_43, %c1_44], %64 {strides = array<i32>} : memref<8x4xf32, #tpu.memory_space<vmem>>, vector<8x1xf32>,
      %84 = vector.extract_strided_slice %14 {offsets = [0, 16], sizes = [8, 8], strides = [1, 1]} : vector<8x32xbf16> to vector<8x8xbf16>
      %85 = vector.extract_strided_slice %16 {offsets = [0, 16], sizes = [8, 8], strides = [1, 1]} : vector<8x32xbf16> to vector<8x8xbf16>
      %86 = vector.extract_strided_slice %18 {offsets = [0, 16], sizes = [8, 8], strides = [1, 1]} : vector<8x32xbf16> to vector<8x8xbf16>
      %cst_45 = arith.constant dense<0.000000e+00> : vector<8x8xf32>
      %87 = tpu.matmul %84, %85, %cst_45 {dimension_numbers = #tpu.dot_dimension_numbers<[1], [1], [0], [0], [0, 0, 1, 0], [], []>} : vector<8x8xbf16>, vector<8x8xbf16>, vector<8x8xf32> -> vector<8x8xf32>
      %cst_46 = arith.constant -1.000000e+30 : f32
      %88 = vector.broadcast %cst_46 : f32 to vector<8x8xf32>
      %89 = arith.select %25, %87, %88 : vector<8x8xi1>, vector<8x8xf32>
      %c0_47 = arith.constant 0 : index
      %c2 = arith.constant 2 : index
      %90 = vector.load %arg9[%c0_47, %c2] : memref<8x4xf32, #tpu.memory_space<vmem>>, vector<8x1xf32>
      %cst_48 = arith.constant dense<0xFF800000> : vector<8xf32>
      %91 = vector.multi_reduction <maximumf>, %89, %cst_48 [1] : vector<8x8xf32> to vector<8xf32>
      %92 = vector.shape_cast %91 : vector<8xf32> to vector<8x1xf32>
      %93 = arith.maximumf %90, %92 : vector<8x1xf32>
      %94 = arith.subf %90, %93 : vector<8x1xf32>
      %95 = math.exp %94 : vector<8x1xf32>
      %96 = vector.broadcast %93 : vector<8x1xf32> to vector<8x8xf32>
      %97 = arith.subf %89, %96 : vector<8x8xf32>
      %98 = math.exp %97 : vector<8x8xf32>
      %c0_49 = arith.constant 0 : index
      %c2_50 = arith.constant 2 : index
      %99 = vector.load %arg10[%c0_49, %c2_50] : memref<8x4xf32, #tpu.memory_space<vmem>>, vector<8x1xf32>
      %100 = arith.mulf %95, %99 : vector<8x1xf32>
      %cst_51 = arith.constant dense<0.000000e+00> : vector<8xf32>
      %101 = vector.multi_reduction <add>, %98, %cst_51 [1] : vector<8x8xf32> to vector<8xf32>
      %102 = vector.shape_cast %101 : vector<8xf32> to vector<8x1xf32>
      %103 = arith.addf %100, %102 : vector<8x1xf32>
      %c0_52 = arith.constant 0 : index
      %c2_53 = arith.constant 2 : index
      %104 = vector.load %arg10[%c0_52, %c2_53] : memref<8x4xf32, #tpu.memory_space<vmem>>, vector<8x1xf32>
      tpu.vector_store %arg10[%c0_52, %c2_53], %103 {strides = array<i32>} : memref<8x4xf32, #tpu.memory_space<vmem>>, vector<8x1xf32>,
      %c0_54 = arith.constant 0 : index
      %c16 = arith.constant 16 : index
      %105 = vector.load %arg11[%c0_54, %c16] : memref<8x32xf32, #tpu.memory_space<vmem>>, vector<8x8xf32>
      %106 = vector.broadcast %95 : vector<8x1xf32> to vector<8x8xf32>
      %107 = arith.mulf %106, %105 : vector<8x8xf32>
      %108 = arith.truncf %98 : vector<8x8xf32> to vector<8x8xbf16>
      %cst_55 = arith.constant dense<0.000000e+00> : vector<8x8xf32>
      %109 = tpu.matmul %108, %86, %cst_55 {dimension_numbers = #tpu.dot_dimension_numbers<[1], [0], [0], [1], [0, 0, 1, 1], [], []>} : vector<8x8xbf16>, vector<8x8xbf16>, vector<8x8xf32> -> vector<8x8xf32>
      %110 = arith.addf %107, %109 : vector<8x8xf32>
      %c0_56 = arith.constant 0 : index
      %c16_57 = arith.constant 16 : index
      %111 = vector.load %arg11[%c0_56, %c16_57] : memref<8x32xf32, #tpu.memory_space<vmem>>, vector<8x8xf32>
      tpu.vector_store %arg11[%c0_56, %c16_57], %110 {strides = array<i32>} : memref<8x32xf32, #tpu.memory_space<vmem>>, vector<8x8xf32>,
      %c0_58 = arith.constant 0 : index
      %c2_59 = arith.constant 2 : index
      %112 = vector.load %arg9[%c0_58, %c2_59] : memref<8x4xf32, #tpu.memory_space<vmem>>, vector<8x1xf32>
      tpu.vector_store %arg9[%c0_58, %c2_59], %93 {strides = array<i32>} : memref<8x4xf32, #tpu.memory_space<vmem>>, vector<8x1xf32>,
      %113 = vector.extract_strided_slice %14 {offsets = [0, 24], sizes = [8, 8], strides = [1, 1]} : vector<8x32xbf16> to vector<8x8xbf16>
      %114 = vector.extract_strided_slice %16 {offsets = [0, 24], sizes = [8, 8], strides = [1, 1]} : vector<8x32xbf16> to vector<8x8xbf16>
      %115 = vector.extract_strided_slice %18 {offsets = [0, 24], sizes = [8, 8], strides = [1, 1]} : vector<8x32xbf16> to vector<8x8xbf16>
      %cst_60 = arith.constant dense<0.000000e+00> : vector<8x8xf32>
      %116 = tpu.matmul %113, %114, %cst_60 {dimension_numbers = #tpu.dot_dimension_numbers<[1], [1], [0], [0], [0, 0, 1, 0], [], []>} : vector<8x8xbf16>, vector<8x8xbf16>, vector<8x8xf32> -> vector<8x8xf32>
      %cst_61 = arith.constant -1.000000e+30 : f32
      %117 = vector.broadcast %cst_61 : f32 to vector<8x8xf32>
      %118 = arith.select %25, %116, %117 : vector<8x8xi1>, vector<8x8xf32>
      %c0_62 = arith.constant 0 : index
      %c3 = arith.constant 3 : index
      %119 = vector.load %arg9[%c0_62, %c3] : memref<8x4xf32, #tpu.memory_space<vmem>>, vector<8x1xf32>
      %cst_63 = arith.constant dense<0xFF800000> : vector<8xf32>
      %120 = vector.multi_reduction <maximumf>, %118, %cst_63 [1] : vector<8x8xf32> to vector<8xf32>
      %121 = vector.shape_cast %120 : vector<8xf32> to vector<8x1xf32>
      %122 = arith.maximumf %119, %121 : vector<8x1xf32>
      %123 = arith.subf %119, %122 : vector<8x1xf32>
      %124 = math.exp %123 : vector<8x1xf32>
      %125 = vector.broadcast %122 : vector<8x1xf32> to vector<8x8xf32>
      %126 = arith.subf %118, %125 : vector<8x8xf32>
      %127 = math.exp %126 : vector<8x8xf32>
      %c0_64 = arith.constant 0 : index
      %c3_65 = arith.constant 3 : index
      %128 = vector.load %arg10[%c0_64, %c3_65] : memref<8x4xf32, #tpu.memory_space<vmem>>, vector<8x1xf32>
      %129 = arith.mulf %124, %128 : vector<8x1xf32>
      %cst_66 = arith.constant dense<0.000000e+00> : vector<8xf32>
      %130 = vector.multi_reduction <add>, %127, %cst_66 [1] : vector<8x8xf32> to vector<8xf32>
      %131 = vector.shape_cast %130 : vector<8xf32> to vector<8x1xf32>
      %132 = arith.addf %129, %131 : vector<8x1xf32>
      %c0_67 = arith.constant 0 : index
      %c3_68 = arith.constant 3 : index
      %133 = vector.load %arg10[%c0_67, %c3_68] : memref<8x4xf32, #tpu.memory_space<vmem>>, vector<8x1xf32>
      tpu.vector_store %arg10[%c0_67, %c3_68], %132 {strides = array<i32>} : memref<8x4xf32, #tpu.memory_space<vmem>>, vector<8x1xf32>,
      %c0_69 = arith.constant 0 : index
      %c24 = arith.constant 24 : index
      %134 = vector.load %arg11[%c0_69, %c24] : memref<8x32xf32, #tpu.memory_space<vmem>>, vector<8x8xf32>
      %135 = vector.broadcast %124 : vector<8x1xf32> to vector<8x8xf32>
      %136 = arith.mulf %135, %134 : vector<8x8xf32>
      %137 = arith.truncf %127 : vector<8x8xf32> to vector<8x8xbf16>
      %cst_70 = arith.constant dense<0.000000e+00> : vector<8x8xf32>
      %138 = tpu.matmul %137, %115, %cst_70 {dimension_numbers = #tpu.dot_dimension_numbers<[1], [0], [0], [1], [0, 0, 1, 1], [], []>} : vector<8x8xbf16>, vector<8x8xbf16>, vector<8x8xf32> -> vector<8x8xf32>
      %139 = arith.addf %136, %138 : vector<8x8xf32>
      %c0_71 = arith.constant 0 : index
      %c24_72 = arith.constant 24 : index
      %140 = vector.load %arg11[%c0_71, %c24_72] : memref<8x32xf32, #tpu.memory_space<vmem>>, vector<8x8xf32>
      tpu.vector_store %arg11[%c0_71, %c24_72], %139 {strides = array<i32>} : memref<8x32xf32, #tpu.memory_space<vmem>>, vector<8x8xf32>,
      %c0_73 = arith.constant 0 : index
      %c3_74 = arith.constant 3 : index
      %141 = vector.load %arg9[%c0_73, %c3_74] : memref<8x4xf32, #tpu.memory_space<vmem>>, vector<8x1xf32>
      tpu.vector_store %arg9[%c0_73, %c3_74], %122 {strides = array<i32>} : memref<8x4xf32, #tpu.memory_space<vmem>>, vector<8x1xf32>,
    } else {
    }
    %c0_i32_4 = arith.constant 0 : i32
    %10 = arith.cmpi eq, %arg2, %c0_i32_4 : i32
    %11 = arith.extui %10 : i1 to i32
    %c0_i32_5 = arith.constant 0 : i32
    %12 = arith.cmpi ne, %11, %c0_i32_5 : i32
    scf.if %12 {
      %c0 = arith.constant 0 : index
      %c0_6 = arith.constant 0 : index
      %13 = vector.load %arg10[%c0, %c0_6] : memref<8x4xf32, #tpu.memory_space<vmem>>, vector<8x1xf32>
      %14 = tpu.reciprocal %13 {approx = true} : vector<8x1xf32> -> vector<8x1xf32>
      %c0_7 = arith.constant 0 : index
      %c0_8 = arith.constant 0 : index
      %15 = vector.load %arg11[%c0_7, %c0_8] : memref<8x32xf32, #tpu.memory_space<vmem>>, vector<8x8xf32>
      %16 = vector.broadcast %14 : vector<8x1xf32> to vector<8x8xf32>
      %17 = arith.mulf %15, %16 : vector<8x8xf32>
      %c0_9 = arith.constant 0 : index
      %c0_10 = arith.constant 0 : index
      %18 = vector.load %arg11[%c0_9, %c0_10] : memref<8x32xf32, #tpu.memory_space<vmem>>, vector<8x8xf32>
      tpu.vector_store %arg11[%c0_9, %c0_10], %17 {strides = array<i32>} : memref<8x32xf32, #tpu.memory_space<vmem>>, vector<8x8xf32>,
      %c0_11 = arith.constant 0 : index
      %c1 = arith.constant 1 : index
      %19 = vector.load %arg10[%c0_11, %c1] : memref<8x4xf32, #tpu.memory_space<vmem>>, vector<8x1xf32>
      %20 = tpu.reciprocal %19 {approx = true} : vector<8x1xf32> -> vector<8x1xf32>
      %c0_12 = arith.constant 0 : index
      %c8 = arith.constant 8 : index
      %21 = vector.load %arg11[%c0_12, %c8] : memref<8x32xf32, #tpu.memory_space<vmem>>, vector<8x8xf32>
      %22 = vector.broadcast %20 : vector<8x1xf32> to vector<8x8xf32>
      %23 = arith.mulf %21, %22 : vector<8x8xf32>
      %c0_13 = arith.constant 0 : index
      %c8_14 = arith.constant 8 : index
      %24 = vector.load %arg11[%c0_13, %c8_14] : memref<8x32xf32, #tpu.memory_space<vmem>>, vector<8x8xf32>
      tpu.vector_store %arg11[%c0_13, %c8_14], %23 {strides = array<i32>} : memref<8x32xf32, #tpu.memory_space<vmem>>, vector<8x8xf32>,
      %c0_15 = arith.constant 0 : index
      %c2 = arith.constant 2 : index
      %25 = vector.load %arg10[%c0_15, %c2] : memref<8x4xf32, #tpu.memory_space<vmem>>, vector<8x1xf32>
      %26 = tpu.reciprocal %25 {approx = true} : vector<8x1xf32> -> vector<8x1xf32>
      %c0_16 = arith.constant 0 : index
      %c16 = arith.constant 16 : index
      %27 = vector.load %arg11[%c0_16, %c16] : memref<8x32xf32, #tpu.memory_space<vmem>>, vector<8x8xf32>
      %28 = vector.broadcast %26 : vector<8x1xf32> to vector<8x8xf32>
      %29 = arith.mulf %27, %28 : vector<8x8xf32>
      %c0_17 = arith.constant 0 : index
      %c16_18 = arith.constant 16 : index
      %30 = vector.load %arg11[%c0_17, %c16_18] : memref<8x32xf32, #tpu.memory_space<vmem>>, vector<8x8xf32>
      tpu.vector_store %arg11[%c0_17, %c16_18], %29 {strides = array<i32>} : memref<8x32xf32, #tpu.memory_space<vmem>>, vector<8x8xf32>,
      %c0_19 = arith.constant 0 : index
      %c3 = arith.constant 3 : index
      %31 = vector.load %arg10[%c0_19, %c3] : memref<8x4xf32, #tpu.memory_space<vmem>>, vector<8x1xf32>
      %32 = tpu.reciprocal %31 {approx = true} : vector<8x1xf32> -> vector<8x1xf32>
      %c0_20 = arith.constant 0 : index
      %c24 = arith.constant 24 : index
      %33 = vector.load %arg11[%c0_20, %c24] : memref<8x32xf32, #tpu.memory_space<vmem>>, vector<8x8xf32>
      %34 = vector.broadcast %32 : vector<8x1xf32> to vector<8x8xf32>
      %35 = arith.mulf %33, %34 : vector<8x8xf32>
      %c0_21 = arith.constant 0 : index
      %c24_22 = arith.constant 24 : index
      %36 = vector.load %arg11[%c0_21, %c24_22] : memref<8x32xf32, #tpu.memory_space<vmem>>, vector<8x8xf32>
      tpu.vector_store %arg11[%c0_21, %c24_22], %35 {strides = array<i32>} : memref<8x32xf32, #tpu.memory_space<vmem>>, vector<8x8xf32>,
      %c0_23 = arith.constant 0 : index
      %c0_24 = arith.constant 0 : index
      %37 = vector.load %arg11[%c0_23, %c0_24] : memref<8x32xf32, #tpu.memory_space<vmem>>, vector<8x32xf32>
      %38 = arith.truncf %37 : vector<8x32xf32> to vector<8x32xbf16>
      %c0_25 = arith.constant 0 : index
      %c0_26 = arith.constant 0 : index
      %39 = vector.load %arg6[%c0_25, %c0_26] : memref<32x32xbf16, #tpu.memory_space<vmem>>, vector<32x32xbf16>
      %cst = arith.constant dense<0.000000e+00> : vector<8x32xf32>
      %40 = tpu.matmul %38, %39, %cst {dimension_numbers = #tpu.dot_dimension_numbers<[1], [0], [0], [1], [0, 0, 1, 1], [], []>} : vector<8x32xbf16>, vector<32x32xbf16>, vector<8x32xf32> -> vector<8x32xf32>
      %c0_27 = arith.constant 0 : index
      %c0_28 = arith.constant 0 : index
      %41 = vector.load %arg7[%c0_27, %c0_28] : memref<1x32xf32, #tpu.memory_space<vmem>>, vector<1x32xf32>
      %42 = vector.broadcast %41 : vector<1x32xf32> to vector<8x32xf32>
      %43 = arith.addf %40, %42 : vector<8x32xf32>
      %c0_29 = arith.constant 0 : index
      %c0_30 = arith.constant 0 : index
      %c0_31 = arith.constant 0 : index
      %44 = vector.load %arg8[%c0_29, %c0_30, %c0_31] : memref<1x8x32xf32, #tpu.memory_space<vmem>>, vector<1x8x32xf32>
      %45 = vector.shape_cast %44 : vector<1x8x32xf32> to vector<8x32xf32>
      %46 = vector.shape_cast %43 : vector<8x32xf32> to vector<1x8x32xf32>
      tpu.vector_store %arg8[%c0_29, %c0_30, %c0_31], %46 {strides = array<i32>} : memref<1x8x32xf32, #tpu.memory_space<vmem>>, vector<1x8x32xf32>,
    } else {
    }
    return
  }
  func.func @transform_0(%arg0: i32, %arg1: i32, %arg2: i32) -> (i32, i32, i32) {
    %c0_i32 = arith.constant 0 : i32
    %c0_i32_0 = arith.constant 0 : i32
    return %arg0, %arg1, %c0_i32 : i32, i32, i32
  }
  func.func @transform_1(%arg0: i32, %arg1: i32, %arg2: i32) -> (i32, i32, i32) {
    %c0_i32 = arith.constant 0 : i32
    %c0_i32_0 = arith.constant 0 : i32
    return %arg0, %arg2, %c0_i32 : i32, i32, i32
  }
  func.func @transform_2(%arg0: i32, %arg1: i32, %arg2: i32) -> (i32, i32, i32) {
    %c0_i32 = arith.constant 0 : i32
    %c0_i32_0 = arith.constant 0 : i32
    return %arg0, %arg2, %c0_i32 : i32, i32, i32
  }
  func.func @transform_3(%arg0: i32, %arg1: i32, %arg2: i32) -> (i32, i32) {
    %c0_i32 = arith.constant 0 : i32
    %c0_i32_0 = arith.constant 0 : i32
    %c0_i32_1 = arith.constant 0 : i32
    return %c0_i32, %c0_i32_0 : i32, i32
  }
  func.func @transform_4(%arg0: i32, %arg1: i32, %arg2: i32) -> (i32, i32) {
    %c0_i32 = arith.constant 0 : i32
    %c0_i32_0 = arith.constant 0 : i32
    %c0_i32_1 = arith.constant 0 : i32
    return %c0_i32, %c0_i32_0 : i32, i32
  }
  func.func @transform_5(%arg0: i32, %arg1: i32, %arg2: i32) -> (i32, i32, i32) {
    %c0_i32 = arith.constant 0 : i32
    %c0_i32_0 = arith.constant 0 : i32
    return %arg0, %arg1, %c0_i32 : i32, i32, i32
  }
}

</mosaic_0001>

<llo_original>
// kernel: causal_self_attention.2
$region0: #{causal_self_attention.2}
  #allocation0 [shape = 'u32[]', space=smem, size = 0x4, offset = 0x4, fixed_abs, tag = 'smem constant byte address 0x4 - core index']
  #allocation1 [shape = 'u32[144,128]{1,0:T(1,128)}', space=vmem, size = 0x12000, scoped, tag = 'internal scratch']
  %s0 = inlined_call_operand.vmem [shape: bf16[2,8,32], index: 0, kind: input, shape index: {}]
  %s1 = inlined_call_operand.vmem [shape: bf16[32,96], index: 1, kind: input, shape index: {}]
  %s2 = inlined_call_operand.vmem [shape: f32[1,96], index: 2, kind: input, shape index: {}]
  %s3 = inlined_call_operand.vmem [shape: bf16[2,8,32], index: 3, kind: output, shape index: {0}]
  %s4 = inlined_call_operand.vmem [shape: bf16[2,8,32], index: 4, kind: output, shape index: {1}]
  %s5 = inlined_call_operand.vmem [shape: bf16[2,8,32], index: 5, kind: output, shape index: {2}]
  %6 = xla_tuple %s3, %s4, %s5
  %s7 = sld [smem:[#allocation0]]
  $region61: #{causal_self_attention.2} parent=0
    _
  %s9 = ssub.s32 1, %s7
  %s10 = scalar_select 0, %s9, %s7
  loop: start=0, step=1, limit=4
  $region2: #{causal_self_attention.2} parent=0 // loop_pre_header
    _
  $region3: #{causal_self_attention.2} parent=0 // loop_header
    %s12 = sphi 0, %s16
    %p13 = scmp.ge.s32.totalorder %s12, 4
    %s19 = sphi 0, %s31
    %s20 = sphi 0, %s27
    %s21 = sphi 0, %s19
    %s22 = sphi 0, %s20
    %s23 = sphi 0, %s21
    %s24 = sphi 0, %s22
    %s36 = sphi 0, %s38
    %s39 = sphi 0, %s36
    %s40 = sphi 0, %s39
    %s56 = sphi 0, %s40
    %s60 = sphi 0, %s60
    %s62 = sphi 0, %s60
    %s63 = sphi 0, %s62
    %s77 = sphi 0, %s63
    %s81 = sphi 0, %s81
    %s83 = sphi 0, %s81
    %s84 = sphi 0, %s83
    %s98 = sphi 0, %s84
    %s106 = sphi 0, %s108
    %s109 = sphi 0, %s106
    %s110 = sphi 0, %s109
    %s126 = sphi 0, %s110
    %s134 = sphi 0, %s136
    %s137 = sphi 0, %s134
    %s138 = sphi 0, %s137
    %s154 = sphi 0, %s138
    %s162 = sphi 0, %s164
    %s165 = sphi 0, %s162
    %s166 = sphi 0, %s165
    %s182 = sphi 0, %s166
  $region4: #{causal_self_attention.2} parent=0 // loop_header_branch
    %15 = sbr.rel (%p13) target = $region8
  $region5: #{causal_self_attention.2} parent=0 // loop_body
    %s17 = ssub.s32 %s12, 1
    %s18 = ssub.s32 %s12, 2
    %s25 = sadd.s32 1, %s20
    %p26 = scmp.ge.s32.totalorder %s25, 1
    %s27 = scalar_select %p26, 0, %s25
    %s28 = sadd.s32 1, %s19
    %s29 = scalar_select %p26, %s28, %s19
    %p30 = scmp.ge.s32.totalorder %s29, 2
    %s31 = scalar_select %p30, 0, %s29
    %s32 = ssub.s32 %s19, %s31
    %s33 = ssub.s32 %s20, %s27
    %s34 = sor.u32 %s32, %s33
    %p35 = scmp.eq.s32.totalorder %s34, 0
    %s37 = sadd.s32 %s36, 1
    %s38 = scalar_select %p35, %s36, %s37
    %p41 = pneg %p35
    %p42 = scmp.eq.s32.totalorder %s12, 1
    %p43 = por %p41, %p42
    %p44 = scmp.ne.s32.totalorder %s36, %s39
    %p45 = scmp.eq.s32.totalorder %s12, 0
    %p46 = por %p44, %p45
    %p47 = scmp.ne.s32.totalorder %s36, %s39
    %p48 = scmp.eq.s32.totalorder %s17, 1
    %p49 = por %p47, %p48
    %p50 = scmp.ne.s32.totalorder %s39, %s40
    %p51 = scmp.eq.s32.totalorder %s17, 0
    %p52 = por %p50, %p51
    %p53 = scmp.ne.s32.totalorder %s39, %s40
    %p54 = scmp.eq.s32.totalorder %s18, 1
    %p55 = por %p53, %p54
    %p57 = scmp.ne.s32.totalorder %s40, %s56
    %p58 = scmp.eq.s32.totalorder %s18, 0
    %p59 = por %p57, %p58
    %s61 = sadd.s32 %s60, 1
    %p64 = scmp.eq.s32.totalorder %s12, 1
    %p65 = scmp.ne.s32.totalorder %s60, %s62
    %p66 = scmp.eq.s32.totalorder %s12, 0
    %p67 = por %p65, %p66
    %p68 = scmp.ne.s32.totalorder %s60, %s62
    %p69 = scmp.eq.s32.totalorder %s17, 1
    %p70 = por %p68, %p69
    %p71 = scmp.ne.s32.totalorder %s62, %s63
    %p72 = scmp.eq.s32.totalorder %s17, 0
    %p73 = por %p71, %p72
    %p74 = scmp.ne.s32.totalorder %s62, %s63
    %p75 = scmp.eq.s32.totalorder %s18, 1
    %p76 = por %p74, %p75
    %p78 = scmp.ne.s32.totalorder %s63, %s77
    %p79 = scmp.eq.s32.totalorder %s18, 0
    %p80 = por %p78, %p79
    %s82 = sadd.s32 %s81, 1
    %p85 = scmp.eq.s32.totalorder %s12, 1
    %p86 = scmp.ne.s32.totalorder %s81, %s83
    %p87 = scmp.eq.s32.totalorder %s12, 0
    %p88 = por %p86, %p87
    %p89 = scmp.ne.s32.totalorder %s81, %s83
    %p90 = scmp.eq.s32.totalorder %s17, 1
    %p91 = por %p89, %p90
    %p92 = scmp.ne.s32.totalorder %s83, %s84
    %p93 = scmp.eq.s32.totalorder %s17, 0
    %p94 = por %p92, %p93
    %p95 = scmp.ne.s32.totalorder %s83, %s84
    %p96 = scmp.eq.s32.totalorder %s18, 1
    %p97 = por %p95, %p96
    %p99 = scmp.ne.s32.totalorder %s84, %s98
    %p100 = scmp.eq.s32.totalorder %s18, 0
    %p101 = por %p99, %p100
    %s102 = ssub.s32 %s19, %s31
    %s103 = ssub.s32 %s20, %s27
    %s104 = sor.u32 %s102, %s103
    %p105 = scmp.eq.s32.totalorder %s104, 0
    %s107 = sadd.s32 %s106, 1
    %s108 = scalar_select %p105, %s106, %s107
    %p111 = pneg %p105
    %p112 = scmp.eq.s32.totalorder %s12, 1
    %p113 = por %p111, %p112
    %p114 = scmp.ne.s32.totalorder %s106, %s109
    %p115 = scmp.eq.s32.totalorder %s12, 0
    %p116 = por %p114, %p115
    %p117 = scmp.ne.s32.totalorder %s106, %s109
    %p118 = scmp.eq.s32.totalorder %s17, 1
    %p119 = por %p117, %p118
    %p120 = scmp.ne.s32.totalorder %s109, %s110
    %p121 = scmp.eq.s32.totalorder %s17, 0
    %p122 = por %p120, %p121
    %p123 = scmp.ne.s32.totalorder %s109, %s110
    %p124 = scmp.eq.s32.totalorder %s18, 1
    %p125 = por %p123, %p124
    %p127 = scmp.ne.s32.totalorder %s110, %s126
    %p128 = scmp.eq.s32.totalorder %s18, 0
    %p129 = por %p127, %p128
    %s130 = ssub.s32 %s19, %s31
    %s131 = ssub.s32 %s20, %s27
    %s132 = sor.u32 %s130, %s131
    %p133 = scmp.eq.s32.totalorder %s132, 0
    %s135 = sadd.s32 %s134, 1
    %s136 = scalar_select %p133, %s134, %s135
    %p139 = pneg %p133
    %p140 = scmp.eq.s32.totalorder %s12, 1
    %p141 = por %p139, %p140
    %p142 = scmp.ne.s32.totalorder %s134, %s137
    %p143 = scmp.eq.s32.totalorder %s12, 0
    %p144 = por %p142, %p143
    %p145 = scmp.ne.s32.totalorder %s134, %s137
    %p146 = scmp.eq.s32.totalorder %s17, 1
    %p147 = por %p145, %p146
    %p148 = scmp.ne.s32.totalorder %s137, %s138
    %p149 = scmp.eq.s32.totalorder %s17, 0
    %p150 = por %p148, %p149
    %p151 = scmp.ne.s32.totalorder %s137, %s138
    %p152 = scmp.eq.s32.totalorder %s18, 1
    %p153 = por %p151, %p152
    %p155 = scmp.ne.s32.totalorder %s138, %s154
    %p156 = scmp.eq.s32.totalorder %s18, 0
    %p157 = por %p155, %p156
    %s158 = ssub.s32 %s19, %s31
    %s159 = ssub.s32 %s20, %s27
    %s160 = sor.u32 %s158, %s159
    %p161 = scmp.eq.s32.totalorder %s160, 0
    %s163 = sadd.s32 %s162, 1
    %s164 = scalar_select %p161, %s162, %s163
    %p167 = pneg %p161
    %p168 = scmp.eq.s32.totalorder %s12, 1
    %p169 = por %p167, %p168
    %p170 = scmp.ne.s32.totalorder %s162, %s165
    %p171 = scmp.eq.s32.totalorder %s12, 0
    %p172 = por %p170, %p171
    %p173 = scmp.ne.s32.totalorder %s162, %s165
    %p174 = scmp.eq.s32.totalorder %s17, 1
    %p175 = por %p173, %p174
    %p176 = scmp.ne.s32.totalorder %s165, %s166
    %p177 = scmp.eq.s32.totalorder %s17, 0
    %p178 = por %p176, %p177
    %p179 = scmp.ne.s32.totalorder %s165, %s166
    %p180 = scmp.eq.s32.totalorder %s18, 1
    %p181 = por %p179, %p180
    %p183 = scmp.ne.s32.totalorder %s166, %s182
    %p184 = scmp.eq.s32.totalorder %s18, 0
    %p185 = por %p183, %p184
    %p186 = scmp.le.s32.totalorder 1, %s12
    %p187 = scmp.lt.s32.totalorder %s12, 3
    %p188 = pnand %p186, %p187
    %p189 = pneg %p188
    // Predicated region
    $region9: #{causal_self_attention.2} parent=5 // pred_check
      _
    $region10: #{causal_self_attention.2} parent=5 // pred_check_branch
      %191 = sbr.rel (%p188) target = $region12
    $region11: #{causal_self_attention.2} parent=5 // pred_region
      %s192 = ssub.s32 %s12, 1
      // Predicated region
      $region13: #{causal_self_attention.2} parent=11 // pred_check
        %p193 = pneg %p73
      $region14: #{causal_self_attention.2} parent=11 // pred_check_branch
        %195 = sbr.rel (%p193) target = $region16
      $region15: #{causal_self_attention.2} parent=11 // pred_region
        _
      $region16: #{causal_self_attention.2} parent=11 // pred_fallthru
        _
      // Predicated region
      $region17: #{causal_self_attention.2} parent=11 // pred_check
        %p196 = pneg %p94
      $region18: #{causal_self_attention.2} parent=11 // pred_check_branch
        %198 = sbr.rel (%p196) target = $region20
      $region19: #{causal_self_attention.2} parent=11 // pred_region
        _
      $region20: #{causal_self_attention.2} parent=11 // pred_fallthru
        _
    $region12: #{causal_self_attention.2} parent=5 // pred_fallthru
      _
    %p199 = scmp.lt.s32.totalorder %s12, 2
    // Predicated region
    $region21: #{causal_self_attention.2} parent=5 // pred_check
      %p200 = pneg %p199
    $region22: #{causal_self_attention.2} parent=5 // pred_check_branch
      %202 = sbr.rel (%p200) target = $region24
    $region23: #{causal_self_attention.2} parent=5 // pred_region
      // Predicated region
      $region25: #{causal_self_attention.2} parent=23 // pred_check
        %p203 = pneg %p46
      $region26: #{causal_self_attention.2} parent=23 // pred_check_branch
        %205 = sbr.rel (%p203) target = $region28
      $region27: #{causal_self_attention.2} parent=23 // pred_region
        %p206 = scmp.lt.s32.totalorder %s19, 1
        %s207 = scalar_select %p206, %s19, 1
        %p208 = scmp.lt.s32.totalorder %s20, 0
        %s209 = scalar_select %p208, %s20, 0
        %s210 = sadd.s32 %s209, %s207
        %s211 = smul.addr %s210, 4
        %s212 = scalar_lea.vmem %s0, %s211
      $region28: #{causal_self_attention.2} parent=23 // pred_fallthru
        _
    $region24: #{causal_self_attention.2} parent=5 // pred_fallthru
      _
    %p213 = scmp.le.s32.totalorder 1, %s12
    %p214 = scmp.lt.s32.totalorder %s12, 3
    %p215 = pnand %p213, %p214
    %p216 = pneg %p215
    // Predicated region
    $region29: #{causal_self_attention.2} parent=5 // pred_check
      _
    $region30: #{causal_self_attention.2} parent=5 // pred_check_branch
      %218 = sbr.rel (%p215) target = $region32
    $region31: #{causal_self_attention.2} parent=5 // pred_region
      %s219 = ssub.s32 %s12, 1
      %p220 = scmp.lt.s32.totalorder %s21, 1
      %s221 = scalar_select %p220, %s21, 1
      %p222 = scmp.lt.s32.totalorder %s22, 0
      %s223 = scalar_select %p222, %s22, 0
      %s224 = sadd.s32 %s223, %s221
      %s225 = smul.addr %s224, 4
      %s226 = scalar_lea.vmem %s0, %s225
      %p227 = pneg %p52
      %p228 = pneg %p49
      %p229 = pneg %p73
      %p230 = pneg %p70
      %p231 = pneg %p94
      %p232 = pneg %p91
      %p233 = pneg %p122
      %p234 = pneg %p119
      %p235 = scmp.lt.s32.totalorder %s21, 1
      %s236 = scalar_select %p235, %s21, 1
      %p237 = scmp.lt.s32.totalorder %s22, 0
      %s238 = scalar_select %p237, %s22, 0
      %s239 = sadd.s32 %s238, %s236
      %s240 = smul.addr %s239, 4
      %s241 = scalar_lea.vmem %s3, %s240
      %p242 = pneg %p150
      %p243 = pneg %p147
      %p244 = scmp.lt.s32.totalorder %s21, 1
      %s245 = scalar_select %p244, %s21, 1
      %p246 = scmp.lt.s32.totalorder %s22, 0
      %s247 = scalar_select %p246, %s22, 0
      %s248 = sadd.s32 %s247, %s245
      %s249 = smul.addr %s248, 4
      %s250 = scalar_lea.vmem %s4, %s249
      %p251 = pneg %p178
      %p252 = pneg %p175
      %p253 = scmp.lt.s32.totalorder %s21, 1
      %s254 = scalar_select %p253, %s21, 1
      %p255 = scmp.lt.s32.totalorder %s22, 0
      %s256 = scalar_select %p255, %s22, 0
      %s257 = sadd.s32 %s256, %s254
      %s258 = smul.addr %s257, 4
      %s259 = scalar_lea.vmem %s5, %s258
      %p260 = scmp.lt.s32.totalorder %s21, 1
      %s261 = scalar_select %p260, %s21, 1
      %p262 = scmp.lt.s32.totalorder %s22, 0
      %s263 = scalar_select %p262, %s22, 0
      %s264 = sadd.s32 %s263, %s261
      %s265 = smul.addr %s264, 4
      %s266 = scalar_lea.vmem %s0, %s265
      %p267 = scmp.lt.s32.totalorder %s21, 1
      %s268 = scalar_select %p267, %s21, 1
      %p269 = scmp.lt.s32.totalorder %s22, 0
      %s270 = scalar_select %p269, %s22, 0
      %s271 = sadd.s32 %s270, %s268
      %s272 = smul.addr %s271, 4
      %s273 = scalar_lea.vmem %s3, %s272
      %p274 = scmp.lt.s32.totalorder %s21, 1
      %s275 = scalar_select %p274, %s21, 1
      %p276 = scmp.lt.s32.totalorder %s22, 0
      %s277 = scalar_select %p276, %s22, 0
      %s278 = sadd.s32 %s277, %s275
      %s279 = smul.addr %s278, 4
      %s280 = scalar_lea.vmem %s4, %s279
      %p281 = scmp.lt.s32.totalorder %s21, 1
      %s282 = scalar_select %p281, %s21, 1
      %p283 = scmp.lt.s32.totalorder %s22, 0
      %s284 = scalar_select %p283, %s22, 0
      %s285 = sadd.s32 %s284, %s282
      %s286 = smul.addr %s285, 4
      %s287 = scalar_lea.vmem %s5, %s286
      %v289 = vld [vmem:[%s266] sm:$0xf]
      %v290 = vld [vmem:[%s1] sm:$0xf]
      %v291 = vld [vmem:[%s1 + $0x4] sm:$0xf]
      %v292 = vld [vmem:[%s1 + $0x8] sm:$0xf]
      %v293 = vld [vmem:[%s1 + $0xc] sm:$0xf]
      %v294 = vld [vmem:[%s2] sm:$0x1]
      %v296 = vlaneseq
      %v297 = vshrl.u32 %v296, 7
      %v298 = vsub.s32 0, %v297
      %v299 = vrot.slane %v294, %v298
      %v305 = vunpack.c.l.b16 %v290
      %v306 = vunpack.c.l.b16 %v291
      %v307 = vunpack.c.l.b16 %v292
      %v308 = vunpack.c.l.b16 %v293
      %v309 = vpack.c.b16 %v306, %v305
      %v310 = vpack.c.b16 %v308, %v307
      %vm313 = vcmask 261120
      %v315 = vsel %vm313, %v289, 0
      %317 = vmatprep.subr.bf16.mxu0 0
      %318 = vmatpush1.bf16.msra.mxu0 %v309
      %319 = vmatprep.subr.bf16.mxu0 0
      %320 = vmatpush1.bf16.msra.mxu0 %v310
      %321 = vmatprep.subr.bf16.mxu0 0
      %322 = vmatpush1.bf16.msra.mxu0 0
      %323 = vmatprep.subr.bf16.mxu0 0
      %324 = vmatpush1.bf16.msra.mxu0 0
      %325 = vmatprep.subr.bf16.mxu0 0
      %326 = vmatpush1.bf16.msra.mxu0 0
      %327 = vmatprep.subr.bf16.mxu0 0
      %328 = vmatpush1.bf16.msra.mxu0 0
      %329 = vmatprep.subr.bf16.mxu0 0
      %330 = vmatpush1.bf16.msra.mxu0 0
      %331 = vmatprep.subr.bf16.mxu0 0
      %332 = vmatpush1.bf16.msra.mxu0 0
      %333 = vmatprep.subr.bf16.mxu0 0
      %334 = vmatpush1.bf16.msra.mxu0 0
      %335 = vmatprep.subr.bf16.mxu0 0
      %336 = vmatpush1.bf16.msra.mxu0 0
      %337 = vmatprep.subr.bf16.mxu0 0
      %338 = vmatpush1.bf16.msra.mxu0 0
      %339 = vmatprep.subr.bf16.mxu0 0
      %340 = vmatpush1.bf16.msra.mxu0 0
      %341 = vmatprep.subr.bf16.mxu0 0
      %342 = vmatpush1.bf16.msra.mxu0 0
      %343 = vmatprep.subr.bf16.mxu0 0
      %344 = vmatpush1.bf16.msra.mxu0 0
      %345 = vmatprep.subr.bf16.mxu0 0
      %346 = vmatpush1.bf16.msra.mxu0 0
      %347 = vmatprep.subr.bf16.mxu0 0
      %348 = vmatpush1.bf16.msra.mxu0 0
      %349 = vmatprep.mubr.bf16.mxu0 0
      %350 = vmatmul.mubr.bf16.gmra.mrb[0].mxu0 %v315
      %v351 = vpop.f32.mrb[0].mxu0
      %v352 = vadd.f32 %v299, %v351
      %v353 = vpop.f32.mrb[0].mxu0
      %v354 = vpop.f32.mrb[0].mxu0
      %v355 = vpop.f32.mrb[0].mxu0
      %356 = vdwg.mxu0
      %v357 = vpack.c.bf16 %v352, %v352
      %vm358 = vcmask 257024
      %359 = vst.msk [vmem:[%s273] sm:$0xf] %vm358, %v357
      %v361 = vunpack.c.l.b16 %v357
      %v362 = vpack.c.b16 %v361, %v361
      %363 = vrot.lane.b32.xlu0 %v362, 96
      %v364 = vpop.permute.xlu0 %363
      %366 = vst.msk [vmem:[%s280] sm:$0xf] %vm358, %v364
      %367 = vrot.lane.b32.xlu0 %v362, 64
      %v368 = vpop.permute.xlu0 %367
      %370 = vst.msk [vmem:[%s287] sm:$0xf] %vm358, %v368
      %p371 = scmp.lt.s32.totalorder %s21, 1
      %s372 = scalar_select %p371, %s21, 1
      %p373 = scmp.lt.s32.totalorder %s22, 0
      %s374 = scalar_select %p373, %s22, 0
      %s375 = sadd.s32 %s374, %s372
      %s376 = smul.addr %s375, 4
      %s377 = scalar_lea.vmem %s3, %s376
      %p378 = scmp.lt.s32.totalorder %s21, 1
      %s379 = scalar_select %p378, %s21, 1
      %p380 = scmp.lt.s32.totalorder %s22, 0
      %s381 = scalar_select %p380, %s22, 0
      %s382 = sadd.s32 %s381, %s379
      %s383 = smul.addr %s382, 4
      %s384 = scalar_lea.vmem %s4, %s383
      %p385 = scmp.lt.s32.totalorder %s21, 1
      %s386 = scalar_select %p385, %s21, 1
      %p387 = scmp.lt.s32.totalorder %s22, 0
      %s388 = scalar_select %p387, %s22, 0
      %s389 = sadd.s32 %s388, %s386
      %s390 = smul.addr %s389, 4
      %s391 = scalar_lea.vmem %s5, %s390
      // Predicated region
      $region33: #{causal_self_attention.2} parent=31 // pred_check
        %p392 = pneg %p119
      $region34: #{causal_self_attention.2} parent=31 // pred_check_branch
        %394 = sbr.rel (%p392) target = $region36
      $region35: #{causal_self_attention.2} parent=31 // pred_region
        _
      $region36: #{causal_self_attention.2} parent=31 // pred_fallthru
        _
      // Predicated region
      $region37: #{causal_self_attention.2} parent=31 // pred_check
        %p395 = pneg %p147
      $region38: #{causal_self_attention.2} parent=31 // pred_check_branch
        %397 = sbr.rel (%p395) target = $region40
      $region39: #{causal_self_attention.2} parent=31 // pred_region
        _
      $region40: #{causal_self_attention.2} parent=31 // pred_fallthru
        _
      // Predicated region
      $region41: #{causal_self_attention.2} parent=31 // pred_check
        %p398 = pneg %p175
      $region42: #{causal_self_attention.2} parent=31 // pred_check_branch
        %400 = sbr.rel (%p398) target = $region44
      $region43: #{causal_self_attention.2} parent=31 // pred_region
        _
      $region44: #{causal_self_attention.2} parent=31 // pred_fallthru
        _
    $region32: #{causal_self_attention.2} parent=5 // pred_fallthru
      _
    %p401 = scmp.le.s32.totalorder 2, %s12
    // Predicated region
    $region45: #{causal_self_attention.2} parent=5 // pred_check
      %p402 = pneg %p401
    $region46: #{causal_self_attention.2} parent=5 // pred_check_branch
      %404 = sbr.rel (%p402) target = $region48
    $region47: #{causal_self_attention.2} parent=5 // pred_region
      %s405 = ssub.s32 %s12, 2
      // Predicated region
      $region49: #{causal_self_attention.2} parent=47 // pred_check
        %p406 = pneg %p125
      $region50: #{causal_self_attention.2} parent=47 // pred_check_branch
        %408 = sbr.rel (%p406) target = $region52
      $region51: #{causal_self_attention.2} parent=47 // pred_region
        %p409 = scmp.lt.s32.totalorder %s23, 1
        %s410 = scalar_select %p409, %s23, 1
        %p411 = scmp.lt.s32.totalorder %s24, 0
        %s412 = scalar_select %p411, %s24, 0
        %s413 = sadd.s32 %s412, %s410
        %s414 = smul.addr %s413, 4
        %s415 = scalar_lea.vmem %s3, %s414
      $region52: #{causal_self_attention.2} parent=47 // pred_fallthru
        _
      // Predicated region
      $region53: #{causal_self_attention.2} parent=47 // pred_check
        %p416 = pneg %p153
      $region54: #{causal_self_attention.2} parent=47 // pred_check_branch
        %418 = sbr.rel (%p416) target = $region56
      $region55: #{causal_self_attention.2} parent=47 // pred_region
        %p419 = scmp.lt.s32.totalorder %s23, 1
        %s420 = scalar_select %p419, %s23, 1
        %p421 = scmp.lt.s32.totalorder %s24, 0
        %s422 = scalar_select %p421, %s24, 0
        %s423 = sadd.s32 %s422, %s420
        %s424 = smul.addr %s423, 4
        %s425 = scalar_lea.vmem %s4, %s424
      $region56: #{causal_self_attention.2} parent=47 // pred_fallthru
        _
      // Predicated region
      $region57: #{causal_self_attention.2} parent=47 // pred_check
        %p426 = pneg %p181
      $region58: #{causal_self_attention.2} parent=47 // pred_check_branch
        %428 = sbr.rel (%p426) target = $region60
      $region59: #{causal_self_attention.2} parent=47 // pred_region
        %p429 = scmp.lt.s32.totalorder %s23, 1
        %s430 = scalar_select %p429, %s23, 1
        %p431 = scmp.lt.s32.totalorder %s24, 0
        %s432 = scalar_select %p431, %s24, 0
        %s433 = sadd.s32 %s432, %s430
        %s434 = smul.addr %s433, 4
        %s435 = scalar_lea.vmem %s5, %s434
      $region60: #{causal_self_attention.2} parent=47 // pred_fallthru
        _
    $region48: #{causal_self_attention.2} parent=5 // pred_fallthru
      _
  $region6: #{causal_self_attention.2} parent=0 // loop_footer
    %s16 = sadd.s32 1, %s12
  $region7: #{causal_self_attention.2} parent=0 // loop_footer_branch
    %11 = sbr.rel target = $region3
  $region8: #{causal_self_attention.2} parent=0 // loop_exit
    _

// kernel: causal_self_attention.3
$region0: #{causal_self_attention.3}
  #allocation0 [shape = 'u32[]', space=smem, size = 0x4, offset = 0x4, fixed_abs, tag = 'smem constant byte address 0x4 - core index']
  #allocation1 [shape = 'u32[144,128]{1,0:T(1,128)}', space=vmem, size = 0x12000, scoped, tag = 'internal scratch']
  #allocation2 [shape = 'f32[8,4]{1,0:T(8,128)}', space=vmem, size = 0x1000, scoped, tag = 'scratch operand']
  #allocation3 [shape = 'f32[8,4]{1,0:T(8,128)}', space=vmem, size = 0x1000, scoped, tag = 'scratch operand']
  #allocation4 [shape = 'f32[8,32]{1,0:T(8,128)}', space=vmem, size = 0x1000, scoped, tag = 'scratch operand']
  %s0 = inlined_call_operand.vmem [shape: bf16[2,8,32], index: 0, kind: input, shape index: {}]
  %s1 = inlined_call_operand.vmem [shape: bf16[2,8,32], index: 1, kind: input, shape index: {}]
  %s2 = inlined_call_operand.vmem [shape: bf16[2,8,32], index: 2, kind: input, shape index: {}]
  %s3 = inlined_call_operand.vmem [shape: bf16[32,32], index: 3, kind: input, shape index: {}]
  %s4 = inlined_call_operand.vmem [shape: f32[1,32], index: 4, kind: input, shape index: {}]
  %s5 = inlined_call_operand.hbm [shape: f32[2,8,32], index: 5, kind: output, shape index: {}]
  %s6 = sld [smem:[#allocation0]]
  $region65: #{causal_self_attention.3} parent=0
    _
  %s8 = ssub.s32 1, %s6
  %s9 = scalar_select 0, %s8, %s6
  $region1: #{causal_self_attention.3} parent=0
    #allocation5 [shape = 'u8[8192]{0}', space=vmem, size = 0x2000, scoped, tag = 'output window, operand 0']
    #allocation6 [shape = 's32[2]{0}', space=sflag, size = 0x8, scoped, tag = 'scoped memory for causal_self_attention.3']
    %10 = vsyncpa [#allocation6], 0
    %s11 = scalar_lea.sflag [#allocation6], 1
    %12 = vsyncpa %s11, 0
    loop: start=0, step=1, limit=4
    $region2: #{causal_self_attention.3} parent=1 // loop_pre_header
      _
    $region3: #{causal_self_attention.3} parent=1 // loop_header
      %s14 = sphi 0, %s18
      %p15 = scmp.ge.s32.totalorder %s14, 4
      %s21 = sphi 0, %s40
      %s22 = sphi 0, %s36
      %s23 = sphi 0, %s32
      %s24 = sphi 0, %s21
      %s25 = sphi 0, %s22
      %s26 = sphi 0, %s23
      %s27 = sphi 0, %s24
      %s28 = sphi 0, %s25
      %s29 = sphi 0, %s26
      %s45 = sphi 0, %s47
      %s48 = sphi 0, %s45
      %s49 = sphi 0, %s48
      %s65 = sphi 0, %s49
      %s73 = sphi 0, %s75
      %s76 = sphi 0, %s73
      %s77 = sphi 0, %s76
      %s93 = sphi 0, %s77
      %s101 = sphi 0, %s103
      %s104 = sphi 0, %s101
      %s105 = sphi 0, %s104
      %s121 = sphi 0, %s105
      %s125 = sphi 0, %s125
      %s127 = sphi 0, %s125
      %s128 = sphi 0, %s127
      %s142 = sphi 0, %s128
      %s146 = sphi 0, %s146
      %s148 = sphi 0, %s146
      %s149 = sphi 0, %s148
      %s163 = sphi 0, %s149
      %s171 = sphi 0, %s173
      %s174 = sphi 0, %s171
      %s175 = sphi 0, %s174
      %s191 = sphi 0, %s175
    $region4: #{causal_self_attention.3} parent=1 // loop_header_branch
      %17 = sbr.rel (%p15) target = $region8
    $region5: #{causal_self_attention.3} parent=1 // loop_body
      %s19 = ssub.s32 %s14, 1
      %s20 = ssub.s32 %s14, 2
      %s30 = sadd.s32 1, %s23
      %p31 = scmp.ge.s32.totalorder %s30, 1
      %s32 = scalar_select %p31, 0, %s30
      %s33 = sadd.s32 1, %s22
      %s34 = scalar_select %p31, %s33, %s22
      %p35 = scmp.ge.s32.totalorder %s34, 1
      %s36 = scalar_select %p35, 0, %s34
      %s37 = sadd.s32 1, %s21
      %s38 = scalar_select %p35, %s37, %s21
      %p39 = scmp.ge.s32.totalorder %s38, 2
      %s40 = scalar_select %p39, 0, %s38
      %s41 = ssub.s32 %s21, %s40
      %s42 = ssub.s32 %s22, %s36
      %s43 = sor.u32 %s41, %s42
      %p44 = scmp.eq.s32.totalorder %s43, 0
      %s46 = sadd.s32 %s45, 1
      %s47 = scalar_select %p44, %s45, %s46
      %p50 = pneg %p44
      %p51 = scmp.eq.s32.totalorder %s14, 1
      %p52 = por %p50, %p51
      %p53 = scmp.ne.s32.totalorder %s45, %s48
      %p54 = scmp.eq.s32.totalorder %s14, 0
      %p55 = por %p53, %p54
      %p56 = scmp.ne.s32.totalorder %s45, %s48
      %p57 = scmp.eq.s32.totalorder %s19, 1
      %p58 = por %p56, %p57
      %p59 = scmp.ne.s32.totalorder %s48, %s49
      %p60 = scmp.eq.s32.totalorder %s19, 0
      %p61 = por %p59, %p60
      %p62 = scmp.ne.s32.totalorder %s48, %s49
      %p63 = scmp.eq.s32.totalorder %s20, 1
      %p64 = por %p62, %p63
      %p66 = scmp.ne.s32.totalorder %s49, %s65
      %p67 = scmp.eq.s32.totalorder %s20, 0
      %p68 = por %p66, %p67
      %s69 = ssub.s32 %s21, %s40
      %s70 = ssub.s32 %s23, %s32
      %s71 = sor.u32 %s69, %s70
      %p72 = scmp.eq.s32.totalorder %s71, 0
      %s74 = sadd.s32 %s73, 1
      %s75 = scalar_select %p72, %s73, %s74
      %p78 = pneg %p72
      %p79 = scmp.eq.s32.totalorder %s14, 1
      %p80 = por %p78, %p79
      %p81 = scmp.ne.s32.totalorder %s73, %s76
      %p82 = scmp.eq.s32.totalorder %s14, 0
      %p83 = por %p81, %p82
      %p84 = scmp.ne.s32.totalorder %s73, %s76
      %p85 = scmp.eq.s32.totalorder %s19, 1
      %p86 = por %p84, %p85
      %p87 = scmp.ne.s32.totalorder %s76, %s77
      %p88 = scmp.eq.s32.totalorder %s19, 0
      %p89 = por %p87, %p88
      %p90 = scmp.ne.s32.totalorder %s76, %s77
      %p91 = scmp.eq.s32.totalorder %s20, 1
      %p92 = por %p90, %p91
      %p94 = scmp.ne.s32.totalorder %s77, %s93
      %p95 = scmp.eq.s32.totalorder %s20, 0
      %p96 = por %p94, %p95
      %s97 = ssub.s32 %s21, %s40
      %s98 = ssub.s32 %s23, %s32
      %s99 = sor.u32 %s97, %s98
      %p100 = scmp.eq.s32.totalorder %s99, 0
      %s102 = sadd.s32 %s101, 1
      %s103 = scalar_select %p100, %s101, %s102
      %p106 = pneg %p100
      %p107 = scmp.eq.s32.totalorder %s14, 1
      %p108 = por %p106, %p107
      %p109 = scmp.ne.s32.totalorder %s101, %s104
      %p110 = scmp.eq.s32.totalorder %s14, 0
      %p111 = por %p109, %p110
      %p112 = scmp.ne.s32.totalorder %s101, %s104
      %p113 = scmp.eq.s32.totalorder %s19, 1
      %p114 = por %p112, %p113
      %p115 = scmp.ne.s32.totalorder %s104, %s105
      %p116 = scmp.eq.s32.totalorder %s19, 0
      %p117 = por %p115, %p116
      %p118 = scmp.ne.s32.totalorder %s104, %s105
      %p119 = scmp.eq.s32.totalorder %s20, 1
      %p120 = por %p118, %p119
      %p122 = scmp.ne.s32.totalorder %s105, %s121
      %p123 = scmp.eq.s32.totalorder %s20, 0
      %p124 = por %p122, %p123
      %s126 = sadd.s32 %s125, 1
      %p129 = scmp.eq.s32.totalorder %s14, 1
      %p130 = scmp.ne.s32.totalorder %s125, %s127
      %p131 = scmp.eq.s32.totalorder %s14, 0
      %p132 = por %p130, %p131
      %p133 = scmp.ne.s32.totalorder %s125, %s127
      %p134 = scmp.eq.s32.totalorder %s19, 1
      %p135 = por %p133, %p134
      %p136 = scmp.ne.s32.totalorder %s127, %s128
      %p137 = scmp.eq.s32.totalorder %s19, 0
      %p138 = por %p136, %p137
      %p139 = scmp.ne.s32.totalorder %s127, %s128
      %p140 = scmp.eq.s32.totalorder %s20, 1
      %p141 = por %p139, %p140
      %p143 = scmp.ne.s32.totalorder %s128, %s142
      %p144 = scmp.eq.s32.totalorder %s20, 0
      %p145 = por %p143, %p144
      %s147 = sadd.s32 %s146, 1
      %p150 = scmp.eq.s32.totalorder %s14, 1
      %p151 = scmp.ne.s32.totalorder %s146, %s148
      %p152 = scmp.eq.s32.totalorder %s14, 0
      %p153 = por %p151, %p152
      %p154 = scmp.ne.s32.totalorder %s146, %s148
      %p155 = scmp.eq.s32.totalorder %s19, 1
      %p156 = por %p154, %p155
      %p157 = scmp.ne.s32.totalorder %s148, %s149
      %p158 = scmp.eq.s32.totalorder %s19, 0
      %p159 = por %p157, %p158
      %p160 = scmp.ne.s32.totalorder %s148, %s149
      %p161 = scmp.eq.s32.totalorder %s20, 1
      %p162 = por %p160, %p161
      %p164 = scmp.ne.s32.totalorder %s149, %s163
      %p165 = scmp.eq.s32.totalorder %s20, 0
      %p166 = por %p164, %p165
      %s167 = ssub.s32 %s21, %s40
      %s168 = ssub.s32 %s22, %s36
      %s169 = sor.u32 %s167, %s168
      %p170 = scmp.eq.s32.totalorder %s169, 0
      %s172 = sadd.s32 %s171, 1
      %s173 = scalar_select %p170, %s171, %s172
      %p176 = pneg %p170
      %p177 = scmp.eq.s32.totalorder %s14, 1
      %p178 = por %p176, %p177
      %p179 = scmp.ne.s32.totalorder %s171, %s174
      %p180 = scmp.eq.s32.totalorder %s14, 0
      %p181 = por %p179, %p180
      %p182 = scmp.ne.s32.totalorder %s171, %s174
      %p183 = scmp.eq.s32.totalorder %s19, 1
      %p184 = por %p182, %p183
      %p185 = scmp.ne.s32.totalorder %s174, %s175
      %p186 = scmp.eq.s32.totalorder %s19, 0
      %p187 = por %p185, %p186
      %p188 = scmp.ne.s32.totalorder %s174, %s175
      %p189 = scmp.eq.s32.totalorder %s20, 1
      %p190 = por %p188, %p189
      %p192 = scmp.ne.s32.totalorder %s175, %s191
      %p193 = scmp.eq.s32.totalorder %s20, 0
      %p194 = por %p192, %p193
      %p195 = scmp.le.s32.totalorder 1, %s14
      %p196 = scmp.lt.s32.totalorder %s14, 3
      %p197 = pnand %p195, %p196
      %p198 = pneg %p197
      // Predicated region
      $region9: #{causal_self_attention.3} parent=5 // pred_check
        _
      $region10: #{causal_self_attention.3} parent=5 // pred_check_branch
        %200 = sbr.rel (%p197) target = $region12
      $region11: #{causal_self_attention.3} parent=5 // pred_region
        %s201 = ssub.s32 %s14, 1
        // Predicated region
        $region13: #{causal_self_attention.3} parent=11 // pred_check
          %p202 = pneg %p138
        $region14: #{causal_self_attention.3} parent=11 // pred_check_branch
          %204 = sbr.rel (%p202) target = $region16
        $region15: #{causal_self_attention.3} parent=11 // pred_region
          _
        $region16: #{causal_self_attention.3} parent=11 // pred_fallthru
          _
        // Predicated region
        $region17: #{causal_self_attention.3} parent=11 // pred_check
          %p205 = pneg %p159
        $region18: #{causal_self_attention.3} parent=11 // pred_check_branch
          %207 = sbr.rel (%p205) target = $region20
        $region19: #{causal_self_attention.3} parent=11 // pred_region
          _
        $region20: #{causal_self_attention.3} parent=11 // pred_fallthru
          _
      $region12: #{causal_self_attention.3} parent=5 // pred_fallthru
        _
      %p208 = scmp.lt.s32.totalorder %s14, 2
      // Predicated region
      $region21: #{causal_self_attention.3} parent=5 // pred_check
        %p209 = pneg %p208
      $region22: #{causal_self_attention.3} parent=5 // pred_check_branch
        %211 = sbr.rel (%p209) target = $region24
      $region23: #{causal_self_attention.3} parent=5 // pred_region
        // Predicated region
        $region25: #{causal_self_attention.3} parent=23 // pred_check
          %p212 = pneg %p55
        $region26: #{causal_self_attention.3} parent=23 // pred_check_branch
          %214 = sbr.rel (%p212) target = $region28
        $region27: #{causal_self_attention.3} parent=23 // pred_region
          %p215 = scmp.lt.s32.totalorder %s21, 1
          %s216 = scalar_select %p215, %s21, 1
          %p217 = scmp.lt.s32.totalorder %s22, 0
          %s218 = scalar_select %p217, %s22, 0
          %s219 = sadd.s32 %s218, %s216
          %s220 = smul.addr %s219, 4
          %s221 = scalar_lea.vmem %s0, %s220
        $region28: #{causal_self_attention.3} parent=23 // pred_fallthru
          _
        // Predicated region
        $region29: #{causal_self_attention.3} parent=23 // pred_check
          %p222 = pneg %p83
        $region30: #{causal_self_attention.3} parent=23 // pred_check_branch
          %224 = sbr.rel (%p222) target = $region32
        $region31: #{causal_self_attention.3} parent=23 // pred_region
          %p225 = scmp.lt.s32.totalorder %s21, 1
          %s226 = scalar_select %p225, %s21, 1
          %p227 = scmp.lt.s32.totalorder %s23, 0
          %s228 = scalar_select %p227, %s23, 0
          %s229 = sadd.s32 %s228, %s226
          %s230 = smul.addr %s229, 4
          %s231 = scalar_lea.vmem %s1, %s230
        $region32: #{causal_self_attention.3} parent=23 // pred_fallthru
          _
        // Predicated region
        $region33: #{causal_self_attention.3} parent=23 // pred_check
          %p232 = pneg %p111
        $region34: #{causal_self_attention.3} parent=23 // pred_check_branch
          %234 = sbr.rel (%p232) target = $region36
        $region35: #{causal_self_attention.3} parent=23 // pred_region
          %p235 = scmp.lt.s32.totalorder %s21, 1
          %s236 = scalar_select %p235, %s21, 1
          %p237 = scmp.lt.s32.totalorder %s23, 0
          %s238 = scalar_select %p237, %s23, 0
          %s239 = sadd.s32 %s238, %s236
          %s240 = smul.addr %s239, 4
          %s241 = scalar_lea.vmem %s2, %s240
        $region36: #{causal_self_attention.3} parent=23 // pred_fallthru
          _
      $region24: #{causal_self_attention.3} parent=5 // pred_fallthru
        _
      %p242 = scmp.le.s32.totalorder 1, %s14
      %p243 = scmp.lt.s32.totalorder %s14, 3
      %p244 = pnand %p242, %p243
      %p245 = pneg %p244
      // Predicated region
      $region37: #{causal_self_attention.3} parent=5 // pred_check
        _
      $region38: #{causal_self_attention.3} parent=5 // pred_check_branch
        %247 = sbr.rel (%p244) target = $region40
      $region39: #{causal_self_attention.3} parent=5 // pred_region
        %s248 = ssub.s32 %s14, 1
        %p249 = scmp.lt.s32.totalorder %s24, 1
        %s250 = scalar_select %p249, %s24, 1
        %p251 = scmp.lt.s32.totalorder %s25, 0
        %s252 = scalar_select %p251, %s25, 0
        %s253 = sadd.s32 %s252, %s250
        %s254 = smul.addr %s253, 4
        %s255 = scalar_lea.vmem %s0, %s254
        %p256 = pneg %p61
        %p257 = pneg %p58
        %p258 = scmp.lt.s32.totalorder %s24, 1
        %s259 = scalar_select %p258, %s24, 1
        %p260 = scmp.lt.s32.totalorder %s26, 0
        %s261 = scalar_select %p260, %s26, 0
        %s262 = sadd.s32 %s261, %s259
        %s263 = smul.addr %s262, 4
        %s264 = scalar_lea.vmem %s1, %s263
        %p265 = pneg %p89
        %p266 = pneg %p86
        %p267 = scmp.lt.s32.totalorder %s24, 1
        %s268 = scalar_select %p267, %s24, 1
        %p269 = scmp.lt.s32.totalorder %s26, 0
        %s270 = scalar_select %p269, %s26, 0
        %s271 = sadd.s32 %s270, %s268
        %s272 = smul.addr %s271, 4
        %s273 = scalar_lea.vmem %s2, %s272
        %p274 = pneg %p117
        %p275 = pneg %p114
        %p276 = pneg %p138
        %p277 = pneg %p135
        %p278 = pneg %p159
        %p279 = pneg %p156
        %p280 = pneg %p187
        %p281 = pneg %p184
        %s282 = sand.u32 %s174, 1
        %s283 = scalar_lea.sflag [#allocation6], %s282
        %s284 = sand.u32 %s174, 1
        %s285 = smul.addr %s284, 8
        %s286 = scalar_lea.vmem [#allocation5], %s285
        %p287 = scmp.lt.s32.totalorder %s24, 1
        %s288 = scalar_select %p287, %s24, 1
        %p289 = scmp.lt.s32.totalorder %s25, 0
        %s290 = scalar_select %p289, %s25, 0
        %s291 = sadd.s32 %s290, %s288
        %s292 = smul.addr %s291, 4
        %s293 = scalar_lea.vmem %s0, %s292
        %p294 = scmp.lt.s32.totalorder %s24, 1
        %s295 = scalar_select %p294, %s24, 1
        %p296 = scmp.lt.s32.totalorder %s26, 0
        %s297 = scalar_select %p296, %s26, 0
        %s298 = sadd.s32 %s297, %s295
        %s299 = smul.addr %s298, 4
        %s300 = scalar_lea.vmem %s1, %s299
        %p301 = scmp.lt.s32.totalorder %s24, 1
        %s302 = scalar_select %p301, %s24, 1
        %p303 = scmp.lt.s32.totalorder %s26, 0
        %s304 = scalar_select %p303, %s26, 0
        %s305 = sadd.s32 %s304, %s302
        %s306 = smul.addr %s305, 4
        %s307 = scalar_lea.vmem %s2, %s306
        %p309 = scmp.eq.s32.totalorder %s26, 0
        // Predicated region
        $region41: #{causal_self_attention.3} parent=39 // pred_check
          %p310 = pneg %p309
        $region42: #{causal_self_attention.3} parent=39 // pred_check_branch
          %312 = sbr.rel (%p310) target = $region44
        $region43: #{causal_self_attention.3} parent=39 // pred_region
          %vm313 = vcmask 31744
          %314 = vst.msk [vmem:[#allocation2] sm:$0xff] %vm313, -1e+30
          %315 = vst.msk [vmem:[#allocation3] sm:$0xff] %vm313, 0.0
          %vm316 = vcmask 261120
          %317 = vst.msk [vmem:[#allocation4] sm:$0xff] %vm316, 0.0
        $region44: #{causal_self_attention.3} parent=39 // pred_fallthru
          _
        %s318 = smul.u32 %s25, 8
        %s319 = smul.u32 %s26, 8
        %s320 = sadd.s32 %s318, 7
        %p321 = scmp.le.s32.totalorder %s319, %s320
        // Predicated region
        $region45: #{causal_self_attention.3} parent=39 // pred_check
          %p322 = pneg %p321
        $region46: #{causal_self_attention.3} parent=39 // pred_check_branch
          %324 = sbr.rel (%p322) target = $region48
        $region47: #{causal_self_attention.3} parent=39 // pred_region
          %v325 = vld [vmem:[%s293] sm:$0xf]
          %v326 = vld [vmem:[%s300] sm:$0xf]
          %v327 = vld [vmem:[%s307] sm:$0xf]
          %v328 = vlaneseq
          %v329 = vshrl.u32 %v328, 7
          %v330 = vstv %s318
          %v331 = vadd.s32 %v330, %v329
          %v332 = vlaneseq
          %v333 = vand.u32 %v332, 127
          %v334 = vstv %s319
          %v335 = vadd.s32 %v334, %v333
          %vm336 = vcmp.ge.s32.totalorder %v331, %v335
          %vm337 = vcmask 64512
          %v339 = vsel %vm337, %v325, 0
          %v342 = vsel %vm337, %v326, 0
          %344 = vmatprep.subr.bf16.mxu0 0
          %345 = vmatpush1.bf16.xpose.msra.mxu0 %v342
          %346 = vmatprep.subr.bf16.mxu0 0
          %347 = vmatpush1.bf16.xpose.msra.mxu0 0
          %348 = vmatprep.subr.bf16.mxu0 0
          %349 = vmatpush1.bf16.xpose.msra.mxu0 0
          %350 = vmatprep.subr.bf16.mxu0 0
          %351 = vmatpush1.bf16.xpose.msra.mxu0 0
          %352 = vmatprep.subr.bf16.mxu0 0
          %353 = vmatpush1.bf16.xpose.msra.mxu0 0
          %354 = vmatprep.subr.bf16.mxu0 0
          %355 = vmatpush1.bf16.xpose.msra.mxu0 0
          %356 = vmatprep.subr.bf16.mxu0 0
          %357 = vmatpush1.bf16.xpose.msra.mxu0 0
          %358 = vmatprep.subr.bf16.mxu0 0
          %359 = vmatpush1.bf16.xpose.msra.mxu0 0
          %360 = vmatprep.subr.bf16.mxu0 0
          %361 = vmatpush1.bf16.xpose.msra.mxu0 0
          %362 = vmatprep.subr.bf16.mxu0 0
          %363 = vmatpush1.bf16.xpose.msra.mxu0 0
          %364 = vmatprep.subr.bf16.mxu0 0
          %365 = vmatpush1.bf16.xpose.msra.mxu0 0
          %366 = vmatprep.subr.bf16.mxu0 0
          %367 = vmatpush1.bf16.xpose.msra.mxu0 0
          %368 = vmatprep.subr.bf16.mxu0 0
          %369 = vmatpush1.bf16.xpose.msra.mxu0 0
          %370 = vmatprep.subr.bf16.mxu0 0
          %371 = vmatpush1.bf16.xpose.msra.mxu0 0
          %372 = vmatprep.subr.bf16.mxu0 0
          %373 = vmatpush1.bf16.xpose.msra.mxu0 0
          %374 = vmatprep.subr.bf16.mxu0 0
          %375 = vmatpush1.bf16.xpose.msra.mxu0 0
          %376 = vmatprep.mubr.bf16.mxu0 0
          %377 = vmatmul.mubr.bf16.gmra.mrb[0].mxu0 %v339
          %v378 = vpop.f32.mrb[0].mxu0
          %v379 = vadd.f32 0.0, %v378
          %v380 = vpop.f32.mrb[0].mxu0
          %v381 = vpop.f32.mrb[0].mxu0
          %v382 = vpop.f32.mrb[0].mxu0
          %383 = vdwg.mxu0
          %v384 = vsel %vm336, %v379, -1e+30
          %v385 = vld [vmem:[#allocation2] sm:$0xff]
          %v386 = vsel %vm337, %v384, -inf
          %387 = vmax.xlane.f32.xlu0 %v386
          %v388 = vpop.xlane.xlu0 %387
          %v389 = vmax.f32 %v385, %v388
          %v390 = vsub.f32 %v385, %v389
          %v391 = vmul.f32 %v390, 1.442695
          %v392 = vpow.pop %v391
          %394 = vset.pattern.permute.xlu0 0
          %395 = vperm.xlu0 %394, %v389
          %v396 = vpop.permute.xlu0 %395
          %v398 = vsub.f32 %v384, %v396
          %v399 = vmul.f32 %v398, 1.442695
          %v400 = vpow.pop %v399
          %v401 = vld [vmem:[#allocation3] sm:$0xff]
          %v402 = vmul.f32 %v392, %v401
          %v403 = vsel %vm337, %v400, 0.0
          %404 = vadd.xlane.f32.xlu0 %v403
          %v405 = vpop.xlane.xlu0 %404
          %v406 = vadd.f32 %v402, %v405
          %vm407 = vcmask 7168
          %408 = vst.msk [vmem:[#allocation3] sm:$0xff] %vm407, %v406
          %v409 = vld [vmem:[#allocation4] sm:$0xff]
          %411 = vset.pattern.permute.xlu0 0
          %412 = vperm.xlu0 %411, %v392
          %v413 = vpop.permute.xlu0 %412
          %v415 = vmul.f32 %v413, %v409
          %v416 = vpack.c.bf16 %v400, %v400
          %v418 = vsel %vm337, %v416, 0
          %vm420 = vcmask 1043456
          %v422 = vsel %vm420, %v327, 0
          %424 = vmatprep.subr.bf16.mxu0 0
          %425 = vmatpush1.bf16.msra.mxu0 %v422
          %426 = vmatprep.subr.bf16.mxu0 0
          %427 = vmatpush1.bf16.msra.mxu0 0
          %428 = vmatprep.subr.bf16.mxu0 0
          %429 = vmatpush1.bf16.msra.mxu0 0
          %430 = vmatprep.subr.bf16.mxu0 0
          %431 = vmatpush1.bf16.msra.mxu0 0
          %432 = vmatprep.subr.bf16.mxu0 0
          %433 = vmatpush1.bf16.msra.mxu0 0
          %434 = vmatprep.subr.bf16.mxu0 0
          %435 = vmatpush1.bf16.msra.mxu0 0
          %436 = vmatprep.subr.bf16.mxu0 0
          %437 = vmatpush1.bf16.msra.mxu0 0
          %438 = vmatprep.subr.bf16.mxu0 0
          %439 = vmatpush1.bf16.msra.mxu0 0
          %440 = vmatprep.subr.bf16.mxu0 0
          %441 = vmatpush1.bf16.msra.mxu0 0
          %442 = vmatprep.subr.bf16.mxu0 0
          %443 = vmatpush1.bf16.msra.mxu0 0
          %444 = vmatprep.subr.bf16.mxu0 0
          %445 = vmatpush1.bf16.msra.mxu0 0
          %446 = vmatprep.subr.bf16.mxu0 0
          %447 = vmatpush1.bf16.msra.mxu0 0
          %448 = vmatprep.subr.bf16.mxu0 0
          %449 = vmatpush1.bf16.msra.mxu0 0
          %450 = vmatprep.subr.bf16.mxu0 0
          %451 = vmatpush1.bf16.msra.mxu0 0
          %452 = vmatprep.subr.bf16.mxu0 0
          %453 = vmatpush1.bf16.msra.mxu0 0
          %454 = vmatprep.subr.bf16.mxu0 0
          %455 = vmatpush1.bf16.msra.mxu0 0
          %456 = vmatprep.mubr.bf16.mxu0 0
          %457 = vmatmul.mubr.bf16.gmra.mrb[0].mxu0 %v418
          %v458 = vpop.f32.mrb[0].mxu0
          %v459 = vadd.f32 0.0, %v458
          %v460 = vpop.f32.mrb[0].mxu0
          %v461 = vpop.f32.mrb[0].mxu0
          %v462 = vpop.f32.mrb[0].mxu0
          %463 = vdwg.mxu0
          %v464 = vadd.f32 %v415, %v459
          %465 = vst.msk [vmem:[#allocation4] sm:$0xff] %vm337, %v464
          %466 = vst.msk [vmem:[#allocation2] sm:$0xff] %vm407, %v389
          %v468 = vunpack.c.l.b16 %v325
          %v469 = vpack.c.b16 %v468, %v468
          %470 = vrot.lane.b32.xlu0 %v469, 120
          %v471 = vpop.permute.xlu0 %470
          %v473 = vunpack.c.l.b16 %v326
          %v474 = vpack.c.b16 %v473, %v473
          %475 = vrot.lane.b32.xlu0 %v474, 120
          %v476 = vpop.permute.xlu0 %475
          %v478 = vsel %vm337, %v471, 0
          %v481 = vsel %vm337, %v476, 0
          %483 = vmatprep.subr.bf16.mxu0 0
          %484 = vmatpush1.bf16.xpose.msra.mxu0 %v481
          %485 = vmatprep.subr.bf16.mxu0 0
          %486 = vmatpush1.bf16.xpose.msra.mxu0 0
          %487 = vmatprep.subr.bf16.mxu0 0
          %488 = vmatpush1.bf16.xpose.msra.mxu0 0
          %489 = vmatprep.subr.bf16.mxu0 0
          %490 = vmatpush1.bf16.xpose.msra.mxu0 0
          %491 = vmatprep.subr.bf16.mxu0 0
          %492 = vmatpush1.bf16.xpose.msra.mxu0 0
          %493 = vmatprep.subr.bf16.mxu0 0
          %494 = vmatpush1.bf16.xpose.msra.mxu0 0
          %495 = vmatprep.subr.bf16.mxu0 0
          %496 = vmatpush1.bf16.xpose.msra.mxu0 0
          %497 = vmatprep.subr.bf16.mxu0 0
          %498 = vmatpush1.bf16.xpose.msra.mxu0 0
          %499 = vmatprep.subr.bf16.mxu0 0
          %500 = vmatpush1.bf16.xpose.msra.mxu0 0
          %501 = vmatprep.subr.bf16.mxu0 0
          %502 = vmatpush1.bf16.xpose.msra.mxu0 0
          %503 = vmatprep.subr.bf16.mxu0 0
          %504 = vmatpush1.bf16.xpose.msra.mxu0 0
          %505 = vmatprep.subr.bf16.mxu0 0
          %506 = vmatpush1.bf16.xpose.msra.mxu0 0
          %507 = vmatprep.subr.bf16.mxu0 0
          %508 = vmatpush1.bf16.xpose.msra.mxu0 0
          %509 = vmatprep.subr.bf16.mxu0 0
          %510 = vmatpush1.bf16.xpose.msra.mxu0 0
          %511 = vmatprep.subr.bf16.mxu0 0
          %512 = vmatpush1.bf16.xpose.msra.mxu0 0
          %513 = vmatprep.subr.bf16.mxu0 0
          %514 = vmatpush1.bf16.xpose.msra.mxu0 0
          %515 = vmatprep.mubr.bf16.mxu0 0
          %516 = vmatmul.mubr.bf16.gmra.mrb[0].mxu0 %v478
          %v517 = vpop.f32.mrb[0].mxu0
          %v518 = vadd.f32 0.0, %v517
          %v519 = vpop.f32.mrb[0].mxu0
          %v520 = vpop.f32.mrb[0].mxu0
          %v521 = vpop.f32.mrb[0].mxu0
          %522 = vdwg.mxu0
          %v523 = vsel %vm336, %v518, -1e+30
          %v524 = vld [vmem:[#allocation2] sm:$0xff]
          %v525 = vsel %vm337, %v523, -inf
          %526 = vmax.xlane.f32.xlu0 %v525
          %v527 = vpop.xlane.xlu0 %526
          %v528 = vmax.f32 %v524, %v527
          %v529 = vsub.f32 %v524, %v528
          %v530 = vmul.f32 %v529, 1.442695
          %v531 = vpow.pop %v530
          %533 = vset.pattern.permute.xlu0 1
          %534 = vperm.xlu0 %533, %v528
          %v535 = vpop.permute.xlu0 %534
          %v537 = vsub.f32 %v523, %v535
          %v538 = vmul.f32 %v537, 1.442695
          %v539 = vpow.pop %v538
          %v540 = vld [vmem:[#allocation3] sm:$0xff]
          %v541 = vmul.f32 %v531, %v540
          %v542 = vsel %vm337, %v539, 0.0
          %543 = vadd.xlane.f32.xlu0 %v542
          %v544 = vpop.xlane.xlu0 %543
          %v545 = vadd.f32 %v541, %v544
          %vm546 = vcmask 15368
          %547 = vst.msk [vmem:[#allocation3] sm:$0xff] %vm546, %v545
          %v548 = vld [vmem:[#allocation4] sm:$0xff]
          %550 = vset.pattern.permute.xlu0 1
          %551 = vperm.xlu0 %550, %v531
          %v552 = vpop.permute.xlu0 %551
          %v554 = vmul.f32 %v552, %v548
          %v555 = vpack.c.bf16 %v539, %v539
          %v557 = vunpack.c.l.b16 %v327
          %v558 = vpack.c.b16 %v557, %v557
          %559 = vrot.lane.b32.xlu0 %v558, 120
          %v560 = vpop.permute.xlu0 %559
          %v562 = vsel %vm337, %v555, 0
          %v565 = vsel %vm420, %v560, 0
          %567 = vmatprep.subr.bf16.mxu0 0
          %568 = vmatpush1.bf16.msra.mxu0 %v565
          %569 = vmatprep.subr.bf16.mxu0 0
          %570 = vmatpush1.bf16.msra.mxu0 0
          %571 = vmatprep.subr.bf16.mxu0 0
          %572 = vmatpush1.bf16.msra.mxu0 0
          %573 = vmatprep.subr.bf16.mxu0 0
          %574 = vmatpush1.bf16.msra.mxu0 0
          %575 = vmatprep.subr.bf16.mxu0 0
          %576 = vmatpush1.bf16.msra.mxu0 0
          %577 = vmatprep.subr.bf16.mxu0 0
          %578 = vmatpush1.bf16.msra.mxu0 0
          %579 = vmatprep.subr.bf16.mxu0 0
          %580 = vmatpush1.bf16.msra.mxu0 0
          %581 = vmatprep.subr.bf16.mxu0 0
          %582 = vmatpush1.bf16.msra.mxu0 0
          %583 = vmatprep.subr.bf16.mxu0 0
          %584 = vmatpush1.bf16.msra.mxu0 0
          %585 = vmatprep.subr.bf16.mxu0 0
          %586 = vmatpush1.bf16.msra.mxu0 0
          %587 = vmatprep.subr.bf16.mxu0 0
          %588 = vmatpush1.bf16.msra.mxu0 0
          %589 = vmatprep.subr.bf16.mxu0 0
          %590 = vmatpush1.bf16.msra.mxu0 0
          %591 = vmatprep.subr.bf16.mxu0 0
          %592 = vmatpush1.bf16.msra.mxu0 0
          %593 = vmatprep.subr.bf16.mxu0 0
          %594 = vmatpush1.bf16.msra.mxu0 0
          %595 = vmatprep.subr.bf16.mxu0 0
          %596 = vmatpush1.bf16.msra.mxu0 0
          %597 = vmatprep.subr.bf16.mxu0 0
          %598 = vmatpush1.bf16.msra.mxu0 0
          %599 = vmatprep.mubr.bf16.mxu0 0
          %600 = vmatmul.mubr.bf16.gmra.mrb[0].mxu0 %v562
          %v601 = vpop.f32.mrb[0].mxu0
          %v602 = vadd.f32 0.0, %v601
          %v603 = vpop.f32.mrb[0].mxu0
          %v604 = vpop.f32.mrb[0].mxu0
          %v605 = vpop.f32.mrb[0].mxu0
          %606 = vdwg.mxu0
          %608 = vrot.lane.b32.xlu0 %v602, 8
          %v609 = vpop.permute.xlu0 %608
          %v611 = vadd.f32 %v554, %v609
          %vm612 = vcmask 130112
          %613 = vst.msk [vmem:[#allocation4] sm:$0xff] %vm612, %v611
          %614 = vst.msk [vmem:[#allocation2] sm:$0xff] %vm546, %v528
          %615 = vrot.lane.b32.xlu0 %v469, 112
          %v616 = vpop.permute.xlu0 %615
          %617 = vrot.lane.b32.xlu0 %v474, 112
          %v618 = vpop.permute.xlu0 %617
          %v620 = vsel %vm337, %v616, 0
          %v623 = vsel %vm337, %v618, 0
          %625 = vmatprep.subr.bf16.mxu0 0
          %626 = vmatpush1.bf16.xpose.msra.mxu0 %v623
          %627 = vmatprep.subr.bf16.mxu0 0
          %628 = vmatpush1.bf16.xpose.msra.mxu0 0
          %629 = vmatprep.subr.bf16.mxu0 0
          %630 = vmatpush1.bf16.xpose.msra.mxu0 0
          %631 = vmatprep.subr.bf16.mxu0 0
          %632 = vmatpush1.bf16.xpose.msra.mxu0 0
          %633 = vmatprep.subr.bf16.mxu0 0
          %634 = vmatpush1.bf16.xpose.msra.mxu0 0
          %635 = vmatprep.subr.bf16.mxu0 0
          %636 = vmatpush1.bf16.xpose.msra.mxu0 0
          %637 = vmatprep.subr.bf16.mxu0 0
          %638 = vmatpush1.bf16.xpose.msra.mxu0 0
          %639 = vmatprep.subr.bf16.mxu0 0
          %640 = vmatpush1.bf16.xpose.msra.mxu0 0
          %641 = vmatprep.subr.bf16.mxu0 0
          %642 = vmatpush1.bf16.xpose.msra.mxu0 0
          %643 = vmatprep.subr.bf16.mxu0 0
          %644 = vmatpush1.bf16.xpose.msra.mxu0 0
          %645 = vmatprep.subr.bf16.mxu0 0
          %646 = vmatpush1.bf16.xpose.msra.mxu0 0
          %647 = vmatprep.subr.bf16.mxu0 0
          %648 = vmatpush1.bf16.xpose.msra.mxu0 0
          %649 = vmatprep.subr.bf16.mxu0 0
          %650 = vmatpush1.bf16.xpose.msra.mxu0 0
          %651 = vmatprep.subr.bf16.mxu0 0
          %652 = vmatpush1.bf16.xpose.msra.mxu0 0
          %653 = vmatprep.subr.bf16.mxu0 0
          %654 = vmatpush1.bf16.xpose.msra.mxu0 0
          %655 = vmatprep.subr.bf16.mxu0 0
          %656 = vmatpush1.bf16.xpose.msra.mxu0 0
          %657 = vmatprep.mubr.bf16.mxu0 0
          %658 = vmatmul.mubr.bf16.gmra.mrb[0].mxu0 %v620
          %v659 = vpop.f32.mrb[0].mxu0
          %v660 = vadd.f32 0.0, %v659
          %v661 = vpop.f32.mrb[0].mxu0
          %v662 = vpop.f32.mrb[0].mxu0
          %v663 = vpop.f32.mrb[0].mxu0
          %664 = vdwg.mxu0
          %v665 = vsel %vm336, %v660, -1e+30
          %v666 = vld [vmem:[#allocation2] sm:$0xff]
          %v667 = vsel %vm337, %v665, -inf
          %668 = vmax.xlane.f32.xlu0 %v667
          %v669 = vpop.xlane.xlu0 %668
          %v670 = vmax.f32 %v666, %v669
          %v671 = vsub.f32 %v666, %v670
          %v672 = vmul.f32 %v671, 1.442695
          %v673 = vpow.pop %v672
          %675 = vset.pattern.permute.xlu0 2
          %676 = vperm.xlu0 %675, %v670
          %v677 = vpop.permute.xlu0 %676
          %v679 = vsub.f32 %v665, %v677
          %v680 = vmul.f32 %v679, 1.442695
          %v681 = vpow.pop %v680
          %v682 = vld [vmem:[#allocation3] sm:$0xff]
          %v683 = vmul.f32 %v673, %v682
          %v684 = vsel %vm337, %v681, 0.0
          %685 = vadd.xlane.f32.xlu0 %v684
          %v686 = vpop.xlane.xlu0 %685
          %v687 = vadd.f32 %v683, %v686
          %vm688 = vcmask 23568
          %689 = vst.msk [vmem:[#allocation3] sm:$0xff] %vm688, %v687
          %v690 = vld [vmem:[#allocation4] sm:$0xff]
          %692 = vset.pattern.permute.xlu0 2
          %693 = vperm.xlu0 %692, %v673
          %v694 = vpop.permute.xlu0 %693
          %v696 = vmul.f32 %v694, %v690
          %v697 = vpack.c.bf16 %v681, %v681
          %698 = vrot.lane.b32.xlu0 %v558, 112
          %v699 = vpop.permute.xlu0 %698
          %v701 = vsel %vm337, %v697, 0
          %v704 = vsel %vm420, %v699, 0
          %706 = vmatprep.subr.bf16.mxu0 0
          %707 = vmatpush1.bf16.msra.mxu0 %v704
          %708 = vmatprep.subr.bf16.mxu0 0
          %709 = vmatpush1.bf16.msra.mxu0 0
          %710 = vmatprep.subr.bf16.mxu0 0
          %711 = vmatpush1.bf16.msra.mxu0 0
          %712 = vmatprep.subr.bf16.mxu0 0
          %713 = vmatpush1.bf16.msra.mxu0 0
          %714 = vmatprep.subr.bf16.mxu0 0
          %715 = vmatpush1.bf16.msra.mxu0 0
          %716 = vmatprep.subr.bf16.mxu0 0
          %717 = vmatpush1.bf16.msra.mxu0 0
          %718 = vmatprep.subr.bf16.mxu0 0
          %719 = vmatpush1.bf16.msra.mxu0 0
          %720 = vmatprep.subr.bf16.mxu0 0
          %721 = vmatpush1.bf16.msra.mxu0 0
          %722 = vmatprep.subr.bf16.mxu0 0
          %723 = vmatpush1.bf16.msra.mxu0 0
          %724 = vmatprep.subr.bf16.mxu0 0
          %725 = vmatpush1.bf16.msra.mxu0 0
          %726 = vmatprep.subr.bf16.mxu0 0
          %727 = vmatpush1.bf16.msra.mxu0 0
          %728 = vmatprep.subr.bf16.mxu0 0
          %729 = vmatpush1.bf16.msra.mxu0 0
          %730 = vmatprep.subr.bf16.mxu0 0
          %731 = vmatpush1.bf16.msra.mxu0 0
          %732 = vmatprep.subr.bf16.mxu0 0
          %733 = vmatpush1.bf16.msra.mxu0 0
          %734 = vmatprep.subr.bf16.mxu0 0
          %735 = vmatpush1.bf16.msra.mxu0 0
          %736 = vmatprep.subr.bf16.mxu0 0
          %737 = vmatpush1.bf16.msra.mxu0 0
          %738 = vmatprep.mubr.bf16.mxu0 0
          %739 = vmatmul.mubr.bf16.gmra.mrb[0].mxu0 %v701
          %v740 = vpop.f32.mrb[0].mxu0
          %v741 = vadd.f32 0.0, %v740
          %v742 = vpop.f32.mrb[0].mxu0
          %v743 = vpop.f32.mrb[0].mxu0
          %v744 = vpop.f32.mrb[0].mxu0
          %745 = vdwg.mxu0
          %747 = vrot.lane.b32.xlu0 %v741, 16
          %v748 = vpop.permute.xlu0 %747
          %v750 = vadd.f32 %v696, %v748
          %vm751 = vcmask 195712
          %752 = vst.msk [vmem:[#allocation4] sm:$0xff] %vm751, %v750
          %753 = vst.msk [vmem:[#allocation2] sm:$0xff] %vm688, %v670
          %754 = vrot.lane.b32.xlu0 %v469, 104
          %v755 = vpop.permute.xlu0 %754
          %756 = vrot.lane.b32.xlu0 %v474, 104
          %v757 = vpop.permute.xlu0 %756
          %v759 = vsel %vm337, %v755, 0
          %v762 = vsel %vm337, %v757, 0
          %764 = vmatprep.subr.bf16.mxu0 0
          %765 = vmatpush1.bf16.xpose.msra.mxu0 %v762
          %766 = vmatprep.subr.bf16.mxu0 0
          %767 = vmatpush1.bf16.xpose.msra.mxu0 0
          %768 = vmatprep.subr.bf16.mxu0 0
          %769 = vmatpush1.bf16.xpose.msra.mxu0 0
          %770 = vmatprep.subr.bf16.mxu0 0
          %771 = vmatpush1.bf16.xpose.msra.mxu0 0
          %772 = vmatprep.subr.bf16.mxu0 0
          %773 = vmatpush1.bf16.xpose.msra.mxu0 0
          %774 = vmatprep.subr.bf16.mxu0 0
          %775 = vmatpush1.bf16.xpose.msra.mxu0 0
          %776 = vmatprep.subr.bf16.mxu0 0
          %777 = vmatpush1.bf16.xpose.msra.mxu0 0
          %778 = vmatprep.subr.bf16.mxu0 0
          %779 = vmatpush1.bf16.xpose.msra.mxu0 0
          %780 = vmatprep.subr.bf16.mxu0 0
          %781 = vmatpush1.bf16.xpose.msra.mxu0 0
          %782 = vmatprep.subr.bf16.mxu0 0
          %783 = vmatpush1.bf16.xpose.msra.mxu0 0
          %784 = vmatprep.subr.bf16.mxu0 0
          %785 = vmatpush1.bf16.xpose.msra.mxu0 0
          %786 = vmatprep.subr.bf16.mxu0 0
          %787 = vmatpush1.bf16.xpose.msra.mxu0 0
          %788 = vmatprep.subr.bf16.mxu0 0
          %789 = vmatpush1.bf16.xpose.msra.mxu0 0
          %790 = vmatprep.subr.bf16.mxu0 0
          %791 = vmatpush1.bf16.xpose.msra.mxu0 0
          %792 = vmatprep.subr.bf16.mxu0 0
          %793 = vmatpush1.bf16.xpose.msra.mxu0 0
          %794 = vmatprep.subr.bf16.mxu0 0
          %795 = vmatpush1.bf16.xpose.msra.mxu0 0
          %796 = vmatprep.mubr.bf16.mxu0 0
          %797 = vmatmul.mubr.bf16.gmra.mrb[0].mxu0 %v759
          %v798 = vpop.f32.mrb[0].mxu0
          %v799 = vadd.f32 0.0, %v798
          %v800 = vpop.f32.mrb[0].mxu0
          %v801 = vpop.f32.mrb[0].mxu0
          %v802 = vpop.f32.mrb[0].mxu0
          %803 = vdwg.mxu0
          %v804 = vsel %vm336, %v799, -1e+30
          %v805 = vld [vmem:[#allocation2] sm:$0xff]
          %v806 = vsel %vm337, %v804, -inf
          %807 = vmax.xlane.f32.xlu0 %v806
          %v808 = vpop.xlane.xlu0 %807
          %v809 = vmax.f32 %v805, %v808
          %v810 = vsub.f32 %v805, %v809
          %v811 = vmul.f32 %v810, 1.442695
          %v812 = vpow.pop %v811
          %814 = vset.pattern.permute.xlu0 3
          %815 = vperm.xlu0 %814, %v809
          %v816 = vpop.permute.xlu0 %815
          %v818 = vsub.f32 %v804, %v816
          %v819 = vmul.f32 %v818, 1.442695
          %v820 = vpow.pop %v819
          %v821 = vld [vmem:[#allocation3] sm:$0xff]
          %v822 = vmul.f32 %v812, %v821
          %v823 = vsel %vm337, %v820, 0.0
          %824 = vadd.xlane.f32.xlu0 %v823
          %v825 = vpop.xlane.xlu0 %824
          %v826 = vadd.f32 %v822, %v825
          %vm827 = vcmask 31768
          %828 = vst.msk [vmem:[#allocation3] sm:$0xff] %vm827, %v826
          %v829 = vld [vmem:[#allocation4] sm:$0xff]
          %831 = vset.pattern.permute.xlu0 3
          %832 = vperm.xlu0 %831, %v812
          %v833 = vpop.permute.xlu0 %832
          %v835 = vmul.f32 %v833, %v829
          %v836 = vpack.c.bf16 %v820, %v820
          %837 = vrot.lane.b32.xlu0 %v558, 104
          %v838 = vpop.permute.xlu0 %837
          %v840 = vsel %vm337, %v836, 0
          %v843 = vsel %vm420, %v838, 0
          %845 = vmatprep.subr.bf16.mxu0 0
          %846 = vmatpush1.bf16.msra.mxu0 %v843
          %847 = vmatprep.subr.bf16.mxu0 0
          %848 = vmatpush1.bf16.msra.mxu0 0
          %849 = vmatprep.subr.bf16.mxu0 0
          %850 = vmatpush1.bf16.msra.mxu0 0
          %851 = vmatprep.subr.bf16.mxu0 0
          %852 = vmatpush1.bf16.msra.mxu0 0
          %853 = vmatprep.subr.bf16.mxu0 0
          %854 = vmatpush1.bf16.msra.mxu0 0
          %855 = vmatprep.subr.bf16.mxu0 0
          %856 = vmatpush1.bf16.msra.mxu0 0
          %857 = vmatprep.subr.bf16.mxu0 0
          %858 = vmatpush1.bf16.msra.mxu0 0
          %859 = vmatprep.subr.bf16.mxu0 0
          %860 = vmatpush1.bf16.msra.mxu0 0
          %861 = vmatprep.subr.bf16.mxu0 0
          %862 = vmatpush1.bf16.msra.mxu0 0
          %863 = vmatprep.subr.bf16.mxu0 0
          %864 = vmatpush1.bf16.msra.mxu0 0
          %865 = vmatprep.subr.bf16.mxu0 0
          %866 = vmatpush1.bf16.msra.mxu0 0
          %867 = vmatprep.subr.bf16.mxu0 0
          %868 = vmatpush1.bf16.msra.mxu0 0
          %869 = vmatprep.subr.bf16.mxu0 0
          %870 = vmatpush1.bf16.msra.mxu0 0
          %871 = vmatprep.subr.bf16.mxu0 0
          %872 = vmatpush1.bf16.msra.mxu0 0
          %873 = vmatprep.subr.bf16.mxu0 0
          %874 = vmatpush1.bf16.msra.mxu0 0
          %875 = vmatprep.subr.bf16.mxu0 0
          %876 = vmatpush1.bf16.msra.mxu0 0
          %877 = vmatprep.mubr.bf16.mxu0 0
          %878 = vmatmul.mubr.bf16.gmra.mrb[0].mxu0 %v840
          %v879 = vpop.f32.mrb[0].mxu0
          %v880 = vadd.f32 0.0, %v879
          %v881 = vpop.f32.mrb[0].mxu0
          %v882 = vpop.f32.mrb[0].mxu0
          %v883 = vpop.f32.mrb[0].mxu0
          %884 = vdwg.mxu0
          %886 = vrot.lane.b32.xlu0 %v880, 24
          %v887 = vpop.permute.xlu0 %886
          %v889 = vadd.f32 %v835, %v887
          %vm890 = vcmask 261312
          %891 = vst.msk [vmem:[#allocation4] sm:$0xff] %vm890, %v889
          %892 = vst.msk [vmem:[#allocation2] sm:$0xff] %vm827, %v809
        $region48: #{causal_self_attention.3} parent=39 // pred_fallthru
          _
        // Predicated region
        $region49: #{causal_self_attention.3} parent=39 // pred_check
          %p893 = pneg %p309
        $region50: #{causal_self_attention.3} parent=39 // pred_check_branch
          %895 = sbr.rel (%p893) target = $region52
        $region51: #{causal_self_attention.3} parent=39 // pred_region
          %v896 = vld [vmem:[#allocation3] sm:$0xff]
          %v897 = vrcp.pop %v896
          %v898 = vld [vmem:[#allocation4] sm:$0xff]
          %900 = vset.pattern.permute.xlu0 0
          %901 = vperm.xlu0 %900, %v897
          %v902 = vpop.permute.xlu0 %901
          %v904 = vmul.f32 %v898, %v902
          %vm905 = vcmask 64512
          %906 = vst.msk [vmem:[#allocation4] sm:$0xff] %vm905, %v904
          %v907 = vld [vmem:[#allocation3] sm:$0xff]
          %v908 = vrcp.pop %v907
          %v909 = vld [vmem:[#allocation4] sm:$0xff]
          %911 = vset.pattern.permute.xlu0 1
          %912 = vperm.xlu0 %911, %v908
          %v913 = vpop.permute.xlu0 %912
          %v915 = vmul.f32 %v909, %v913
          %vm916 = vcmask 130112
          %917 = vst.msk [vmem:[#allocation4] sm:$0xff] %vm916, %v915
          %v918 = vld [vmem:[#allocation3] sm:$0xff]
          %v919 = vrcp.pop %v918
          %v920 = vld [vmem:[#allocation4] sm:$0xff]
          %922 = vset.pattern.permute.xlu0 2
          %923 = vperm.xlu0 %922, %v919
          %v924 = vpop.permute.xlu0 %923
          %v926 = vmul.f32 %v920, %v924
          %vm927 = vcmask 195712
          %928 = vst.msk [vmem:[#allocation4] sm:$0xff] %vm927, %v926
          %v929 = vld [vmem:[#allocation3] sm:$0xff]
          %v930 = vrcp.pop %v929
          %v931 = vld [vmem:[#allocation4] sm:$0xff]
          %933 = vset.pattern.permute.xlu0 3
          %934 = vperm.xlu0 %933, %v930
          %v935 = vpop.permute.xlu0 %934
          %v937 = vmul.f32 %v931, %v935
          %vm938 = vcmask 261312
          %939 = vst.msk [vmem:[#allocation4] sm:$0xff] %vm938, %v937
          %v940 = vld [vmem:[#allocation4] sm:$0xff]
          %v941 = vpack.c.bf16 %v940, %v940
          %v942 = vld [vmem:[%s3] sm:$0xf]
          %v943 = vld [vmem:[%s3 + $0x4] sm:$0xf]
          %v944 = vld [vmem:[%s3 + $0x8] sm:$0xf]
          %v945 = vld [vmem:[%s3 + $0xc] sm:$0xf]
          %v946 = vld [vmem:[%s4] sm:$0x1]
          %v948 = vlaneseq
          %v949 = vshrl.u32 %v948, 7
          %v950 = vsub.s32 0, %v949
          %v951 = vrot.slane %v946, %v950
          %v957 = vunpack.c.l.b16 %v942
          %v958 = vunpack.c.l.b16 %v943
          %v959 = vunpack.c.l.b16 %v944
          %v960 = vunpack.c.l.b16 %v945
          %v961 = vpack.c.b16 %v958, %v957
          %v962 = vpack.c.b16 %v960, %v959
          %vm965 = vcmask 261120
          %v967 = vsel %vm965, %v941, 0
          %969 = vmatprep.subr.bf16.mxu0 0
          %970 = vmatpush1.bf16.msra.mxu0 %v961
          %971 = vmatprep.subr.bf16.mxu0 0
          %972 = vmatpush1.bf16.msra.mxu0 %v962
          %973 = vmatprep.subr.bf16.mxu0 0
          %974 = vmatpush1.bf16.msra.mxu0 0
          %975 = vmatprep.subr.bf16.mxu0 0
          %976 = vmatpush1.bf16.msra.mxu0 0
          %977 = vmatprep.subr.bf16.mxu0 0
          %978 = vmatpush1.bf16.msra.mxu0 0
          %979 = vmatprep.subr.bf16.mxu0 0
          %980 = vmatpush1.bf16.msra.mxu0 0
          %981 = vmatprep.subr.bf16.mxu0 0
          %982 = vmatpush1.bf16.msra.mxu0 0
          %983 = vmatprep.subr.bf16.mxu0 0
          %984 = vmatpush1.bf16.msra.mxu0 0
          %985 = vmatprep.subr.bf16.mxu0 0
          %986 = vmatpush1.bf16.msra.mxu0 0
          %987 = vmatprep.subr.bf16.mxu0 0
          %988 = vmatpush1.bf16.msra.mxu0 0
          %989 = vmatprep.subr.bf16.mxu0 0
          %990 = vmatpush1.bf16.msra.mxu0 0
          %991 = vmatprep.subr.bf16.mxu0 0
          %992 = vmatpush1.bf16.msra.mxu0 0
          %993 = vmatprep.subr.bf16.mxu0 0
          %994 = vmatpush1.bf16.msra.mxu0 0
          %995 = vmatprep.subr.bf16.mxu0 0
          %996 = vmatpush1.bf16.msra.mxu0 0
          %997 = vmatprep.subr.bf16.mxu0 0
          %998 = vmatpush1.bf16.msra.mxu0 0
          %999 = vmatprep.subr.bf16.mxu0 0
          %1000 = vmatpush1.bf16.msra.mxu0 0
          %1001 = vmatprep.mubr.bf16.mxu0 0
          %1002 = vmatmul.mubr.bf16.gmra.mrb[0].mxu0 %v967
          %v1003 = vpop.f32.mrb[0].mxu0
          %v1004 = vadd.f32 %v951, %v1003
          %v1005 = vpop.f32.mrb[0].mxu0
          %v1006 = vpop.f32.mrb[0].mxu0
          %v1007 = vpop.f32.mrb[0].mxu0
          %1008 = vdwg.mxu0
          %1009 = vst.msk [vmem:[%s286] sm:$0xff] %vm965, %v1004
        $region52: #{causal_self_attention.3} parent=39 // pred_fallthru
          _
        %s1010 = sand.u32 %s174, 1
        %s1011 = scalar_lea.sflag [#allocation6], %s1010
        %s1012 = sand.u32 %s174, 1
        %s1013 = smul.addr %s1012, 8
        %s1014 = scalar_lea.vmem [#allocation5], %s1013
        // Predicated region
        $region53: #{causal_self_attention.3} parent=39 // pred_check
          %p1015 = pneg %p184
        $region54: #{causal_self_attention.3} parent=39 // pred_check_branch
          %1017 = sbr.rel (%p1015) target = $region56
        $region55: #{causal_self_attention.3} parent=39 // pred_region
          %s1019 = ssub.s32 128, 128
          %1020 = vsyncadd %s1011, %s1019
          %s1021 = sadd.s32 %s25, %s24
          %s1022 = smul.addr %s1021, 128
          %s1023 = scalar_lea.hbm %s5, %s1022
          %s1025 = sshll.u32 %s1014, 4
          %s1026 = int_to_ptr.vmem [resolvable:$true] %s1025
          %1028 = dma.vmem_to_hbm [thread:$0]  %s1026, 128, %s1023, %s1011
        $region56: #{causal_self_attention.3} parent=39 // pred_fallthru
          _
      $region40: #{causal_self_attention.3} parent=5 // pred_fallthru
        _
      %p1029 = scmp.le.s32.totalorder 2, %s14
      // Predicated region
      $region57: #{causal_self_attention.3} parent=5 // pred_check
        %p1030 = pneg %p1029
      $region58: #{causal_self_attention.3} parent=5 // pred_check_branch
        %1032 = sbr.rel (%p1030) target = $region60
      $region59: #{causal_self_attention.3} parent=5 // pred_region
        %s1033 = ssub.s32 %s14, 2
        // Predicated region
        $region61: #{causal_self_attention.3} parent=59 // pred_check
          %p1034 = pneg %p190
        $region62: #{causal_self_attention.3} parent=59 // pred_check_branch
          %1036 = sbr.rel (%p1034) target = $region64
        $region63: #{causal_self_attention.3} parent=59 // pred_region
          %s1037 = sand.u32 %s175, 1
          %s1038 = scalar_lea.sflag [#allocation6], %s1037
          %s1039 = sand.u32 %s175, 1
          %s1040 = smul.addr %s1039, 8
          %s1041 = scalar_lea.vmem [#allocation5], %s1040
          %1042 = dma.done %s1038, 128
        $region64: #{causal_self_attention.3} parent=59 // pred_fallthru
          _
      $region60: #{causal_self_attention.3} parent=5 // pred_fallthru
        _
    $region6: #{causal_self_attention.3} parent=1 // loop_footer
      %s18 = sadd.s32 1, %s14
    $region7: #{causal_self_attention.3} parent=1 // loop_footer_branch
      %13 = sbr.rel target = $region3
    $region8: #{causal_self_attention.3} parent=1 // loop_exit
      _
    %1043 = vsyncpa [#allocation6], 1
    %s1044 = scalar_lea.sflag [#allocation6], 1
    %1045 = vsyncpa %s1044, 1

</llo_original>
